<compile_context>
chip_gen: v6e
topology: v6e:2x2x1
jax: 0.10.0
libtpu: 0.0.40
codegen_flags: <defaults>
</compile_context>

<pallas_src>
import functools

import jax
import jax.numpy as jnp
from jax.experimental import pallas as pl
from jax.experimental.pallas import tpu as pltpu


def _gradient_model_kernel(xy_ref, w1_ref, b1_ref, w2_ref, b2_ref,
                           w3_ref, b3_ref, o_ref, acc_ref,
                           *, n_rows, block_rows, mxu_dtype, mxu_precision):
    i = pl.program_id(0)
    n_tiles = pl.num_programs(0)

    @pl.when(i == 0)
    def _init():
        acc_ref[...] = jnp.zeros_like(acc_ref)

    # ---- fc1: single fused [x|y] operand; the w-term is pre-folded into b1 -
    h1 = jnp.dot(xy_ref[...], w1_ref[...],
                 preferred_element_type=jnp.float32,
                 precision=mxu_precision)                    # (TN, H) f32
    h1 = jnp.maximum(h1 + b1_ref[...], 0.0)                  # bias + ReLU, f32

    # ---- fc2 ----------------------------------------------------------------
    h2 = jnp.dot(h1.astype(mxu_dtype), w2_ref[...],
                 preferred_element_type=jnp.float32,
                 precision=mxu_precision)
    h2 = jnp.maximum(h2 + b2_ref[...], 0.0)                  # (TN, H) f32

    # ---- partial batch sum (mean is hoisted above fc3) ----------------------
    use_mxu_reduce = block_rows >= 1024                      # static

    def _row_sum(h):
        if use_mxu_reduce:
            # MXU is nearly idle here: do the cross-sublane reduction there
            # instead of the XLU/VPU once tiles get big.
            ones = jnp.ones((1, block_rows), jnp.float32)
            return jnp.dot(ones, h, preferred_element_type=jnp.float32,
                           precision=jax.lax.Precision.HIGHEST)
        return jnp.sum(h, axis=0, keepdims=True)

    if n_rows % block_rows == 0:
        # No ragged tail possible: hot path never pays for masking.
        acc_ref[...] += _row_sum(h2)
    else:
        @pl.when(i < n_tiles - 1)
        def _full_tile():
            acc_ref[...] += _row_sum(h2)

        @pl.when(i == n_tiles - 1)
        def _ragged_tile():
            rows_left = n_rows - i * block_rows
            keep = jax.lax.broadcasted_iota(
                jnp.int32, (block_rows, 1), 0) < rows_left
            # where (not multiply): padded rows hold unspecified bits
            # (possibly NaN) and 0 * NaN would poison the accumulator.
            acc_ref[...] += _row_sum(jnp.where(keep, h2, 0.0))

    # ---- finalize: mean, then the now single-row fc3 ------------------------
    @pl.when(i == n_tiles - 1)
    def _finalize():
        h_mean = acc_ref[...] * (1.0 / n_rows)               # (1, H) f32
        out = jnp.dot(h_mean.astype(mxu_dtype), w3_ref[...],
                      preferred_element_type=jnp.float32,
                      precision=mxu_precision)
        o_ref[...] = out + b3_ref[...]                       # (1, P)


def gradient_model_forward(x, y, w, params, *, block_rows=4096,
                           mxu_dtype=jnp.bfloat16):
    """Pallas equivalent of GradientModel.forward(x, y, w) -> (n_parameters,).

    On v5e prefer mxu_dtype=jnp.float32: its VPU has no bf16, so the per-tile
    casts are pure overhead and these shapes are nowhere near MXU limits.
    """
    w1, b1, w2, b2, w3, b3 = params
    n, n_in = x.shape
    n_out = y.shape[1]
    n_par = w.shape[0]
    H = w1.shape[1]
    P = w3.shape[1]
    d_xy = n_in + n_out

    mxu_precision = (jax.lax.Precision.HIGHEST
                     if mxu_dtype == jnp.float32 else None)

    # One-time weight prep (off the per-tile path):
    #  * fold the grid-invariant w-contribution into an effective fc1 bias
    #  * fuse the x / y slices of W1 into a single MXU operand
    b1_eff = (b1.reshape(1, H)
              + w.reshape(1, n_par).astype(jnp.float32) @ w1[d_xy:]
              ).astype(jnp.float32)
    w1xy = w1[:d_xy].astype(mxu_dtype)
    w2c = w2.astype(mxu_dtype)
    w3c = w3.astype(mxu_dtype)

    # Fuse x|y into one operand and cast to the MXU dtype in the same XLA
    # pass (in production the producer would emit this dtype/layout directly,
    # halving the kernel's HBM read stream for bf16).
    xy = jnp.concatenate([x, y], axis=1).astype(mxu_dtype)   # (N, d_xy)

    # Batch tiling: whole batch when it fits, else 8-row-aligned tiles
    # (ragged tail handled in-kernel).
    if block_rows >= n:
        tn = n
    else:
        tn = min(((block_rows + 7) // 8) * 8, n)
    n_tiles = pl.cdiv(n, tn)

    full = lambda shape: pl.BlockSpec(shape, lambda i: (0,) * len(shape))

    kernel = functools.partial(_gradient_model_kernel, n_rows=n,
                               block_rows=tn, mxu_dtype=mxu_dtype,
                               mxu_precision=mxu_precision)

    out = pl.pallas_call(
        kernel,
        out_shape=jax.ShapeDtypeStruct((1, P), jnp.float32),
        grid=(n_tiles,),
        in_specs=[
            pl.BlockSpec((tn, d_xy), lambda i: (i, 0)),      # xy (batch-tiled)
            full((d_xy, H)), full((1, H)),                   # fc1
            full((H, H)), full((1, H)),                      # fc2
            full((H, P)), full((1, P)),                      # fc3
        ],
        out_specs=full((1, P)),
        scratch_shapes=[pltpu.VMEM((1, H), jnp.float32)],
        compiler_params=pltpu.CompilerParams(
            # Batch axis is a reduction feeding a resident accumulator and a
            # single finalize write: must stay "arbitrary", never "parallel".
            dimension_semantics=("arbitrary",),
            # Big batch tiles: lift the scoped-VMEM default (16 MiB on v5e)
            # while staying well under v7x's 64 MiB physical VMEM.
            vmem_limit_bytes=48 * 1024 * 1024),
    )(xy, w1xy, b1_eff, w2c, b2.reshape(1, H).astype(jnp.float32),
      w3c, b3.reshape(1, P).astype(jnp.float32))
    return out[0]                                            # (P,)


def init_params(key, n_inputs, n_outputs, n_parameters, hidden_size):
    """Deterministic init mirroring nn.Linear's U(-1/sqrt(fan_in), 1/sqrt(fan_in)).

    Weights are stored (in, out) so the kernel computes z @ W + b, equivalent
    to PyTorch's x @ W.T + b with W of shape (out, in).
    """
    d_in = n_inputs + n_outputs + n_parameters
    ks = jax.random.split(key, 6)

    def lin(kw, kb, fan_in, fan_out):
        bound = 1.0 / jnp.sqrt(fan_in)
        W = jax.random.uniform(kw, (fan_in, fan_out), jnp.float32, -bound, bound)
        b = jax.random.uniform(kb, (fan_out,), jnp.float32, -bound, bound)
        return W, b

    w1, b1 = lin(ks[0], ks[1], d_in, hidden_size)
    w2, b2 = lin(ks[2], ks[3], hidden_size, hidden_size)
    w3, b3 = lin(ks[4], ks[5], hidden_size, n_parameters)
    return (w1, b1, w2, b2, w3, b3)


def reference_forward(x, y, w, params):
    """Pure-JAX f32 reference with the original module's structure."""
    w1, b1, w2, b2, w3, b3 = params
    n = x.shape[0]
    w_exp = jnp.broadcast_to(w.reshape(1, -1), (n, w.shape[0]))
    z = jnp.concatenate([x, y, w_exp], axis=1)
    h = jax.nn.relu(z @ w1 + b1)
    h = jax.nn.relu(h @ w2 + b2)
    return jnp.mean(h @ w3 + b3, axis=0)


if __name__ == "__main__":
    n_inputs, n_outputs, n_parameters, hidden_size = 6, 2, 4, 32
    batch = 8

    key = jax.random.PRNGKey(0)
    kx, ky, kw, kp = jax.random.split(key, 4)
    x = jax.random.normal(kx, (batch, n_inputs), jnp.float32)
    y = jax.random.normal(ky, (batch, n_outputs), jnp.float32)
    w = jax.random.normal(kw, (n_parameters,), jnp.float32)
    params = init_params(kp, n_inputs, n_outputs, n_parameters, hidden_size)

    ref = reference_forward(x, y, w, params)

    # 1) exact-f32 MXU path (precision=HIGHEST), single full-batch tile
    out_f32 = jax.block_until_ready(
        gradient_model_forward(x, y, w, params, mxu_dtype=jnp.float32))
    assert out_f32.shape == (n_parameters,)
    assert jnp.allclose(out_f32, ref, atol=1e-4, rtol=1e-4), (out_f32, ref)

    # 2) default bf16-on-MXU path (v6e/v7x throughput)
    out_bf16 = jax.block_until_ready(gradient_model_forward(x, y, w, params))
    assert out_bf16.shape == (n_parameters,)
    assert jnp.allclose(out_bf16, ref, atol=5e-2, rtol=5e-2), (out_bf16, ref)

    # 3) multi-tile grid + resident accumulator + gated ragged tail (VPU reduce)
    batch2 = 300
    kx2, ky2 = jax.random.split(jax.random.PRNGKey(1), 2)
    x2 = jax.random.normal(kx2, (batch2, n_inputs), jnp.float32)
    y2 = jax.random.normal(ky2, (batch2, n_outputs), jnp.float32)
    ref2 = reference_forward(x2, y2, w, params)
    out2_f32 = jax.block_until_ready(
        gradient_model_forward(x2, y2, w, params, block_rows=128,
                               mxu_dtype=jnp.float32))
    assert jnp.allclose(out2_f32, ref2, atol=1e-4, rtol=1e-4), (out2_f32, ref2)
    out2_bf16 = jax.block_until_ready(
        gradient_model_forward(x2, y2, w, params, block_rows=128))
    assert jnp.allclose(out2_bf16, ref2, atol=5e-2, rtol=5e-2), (out2_bf16, ref2)

    # 4) large tiles: MXU ones-vector batch reduce + ragged tail + raised VMEM
    batch3 = 2500
    kx3, ky3 = jax.random.split(jax.random.PRNGKey(2), 2)
    x3 = jax.random.normal(kx3, (batch3, n_inputs), jnp.float32)
    y3 = jax.random.normal(ky3, (batch3, n_outputs), jnp.float32)
    ref3 = reference_forward(x3, y3, w, params)
    out3_f32 = jax.block_until_ready(
        gradient_model_forward(x3, y3, w, params, block_rows=1024,
                               mxu_dtype=jnp.float32))
    assert jnp.allclose(out3_f32, ref3, atol=1e-3, rtol=1e-3), (out3_f32, ref3)
    out3_bf16 = jax.block_until_ready(
        gradient_model_forward(x3, y3, w, params, block_rows=1024))
    assert jnp.allclose(out3_bf16, ref3, atol=5e-2, rtol=5e-2), (out3_bf16, ref3)

    print("KERNEL_OK")
</pallas_src>

<mosaic_0001>
module attributes {stable_mosaic.version = 11 : i64} {
  func.func @_gradient_model_kernel(%arg0: i32, %arg1: memref<8x8xf32, #tpu.memory_space<vmem>>, %arg2: memref<8x32xf32, #tpu.memory_space<vmem>>, %arg3: memref<1x32xf32, #tpu.memory_space<vmem>>, %arg4: memref<32x32xf32, #tpu.memory_space<vmem>>, %arg5: memref<1x32xf32, #tpu.memory_space<vmem>>, %arg6: memref<32x4xf32, #tpu.memory_space<vmem>>, %arg7: memref<1x4xf32, #tpu.memory_space<vmem>>, %arg8: memref<1x4xf32, #tpu.memory_space<vmem>>, %arg9: memref<1x32xf32, #tpu.memory_space<vmem>>) attributes {dimension_semantics = [#tpu.dimension_semantics<arbitrary>], iteration_bounds = array<i64: 1>, scalar_prefetch = 0 : i64, scratch_operands = 1 : i64, tpu.core_type = #tpu.core_type<tc>, window_params = [{transform_indices = @transform_0, window_bounds = array<i64: 8, 8>}, {pipeline_mode = #tpu.pipeline_mode<synchronous>, transform_indices = @transform_1, window_bounds = array<i64: 8, 32>}, {pipeline_mode = #tpu.pipeline_mode<synchronous>, transform_indices = @transform_2, window_bounds = array<i64: 1, 32>}, {pipeline_mode = #tpu.pipeline_mode<synchronous>, transform_indices = @transform_3, window_bounds = array<i64: 32, 32>}, {pipeline_mode = #tpu.pipeline_mode<synchronous>, transform_indices = @transform_4, window_bounds = array<i64: 1, 32>}, {pipeline_mode = #tpu.pipeline_mode<synchronous>, transform_indices = @transform_5, window_bounds = array<i64: 32, 4>}, {pipeline_mode = #tpu.pipeline_mode<synchronous>, transform_indices = @transform_6, window_bounds = array<i64: 1, 4>}, {pipeline_mode = #tpu.pipeline_mode<synchronous>, transform_indices = @transform_7, window_bounds = array<i64: 1, 4>}]} {
    %c0_i32 = arith.constant 0 : i32
    %0 = arith.cmpi eq, %arg0, %c0_i32 : i32
    %1 = arith.extui %0 : i1 to i32
    %c0_i32_0 = arith.constant 0 : i32
    %2 = arith.cmpi ne, %1, %c0_i32_0 : i32
    scf.if %2 {
      %cst_20 = arith.constant 0.000000e+00 : f32
      %26 = vector.broadcast %cst_20 : f32 to vector<1x32xf32>
      %c0_21 = arith.constant 0 : index
      %c0_22 = arith.constant 0 : index
      %27 = vector.load %arg9[%c0_21, %c0_22] : memref<1x32xf32, #tpu.memory_space<vmem>>, vector<1x32xf32>
      tpu.vector_store %arg9[%c0_21, %c0_22], %26 {strides = array<i32>} : memref<1x32xf32, #tpu.memory_space<vmem>>, vector<1x32xf32>,
    } else {
    }
    %c0 = arith.constant 0 : index
    %c0_1 = arith.constant 0 : index
    %3 = vector.load %arg1[%c0, %c0_1] : memref<8x8xf32, #tpu.memory_space<vmem>>, vector<8x8xf32>
    %c0_2 = arith.constant 0 : index
    %c0_3 = arith.constant 0 : index
    %4 = vector.load %arg2[%c0_2, %c0_3] : memref<8x32xf32, #tpu.memory_space<vmem>>, vector<8x32xf32>
    %cst = arith.constant dense<0.000000e+00> : vector<8x32xf32>
    %5 = tpu.matmul %3, %4, %cst {dimension_numbers = #tpu.dot_dimension_numbers<[1], [0], [0], [1], [0, 0, 1, 1], [], []>, precision = #tpu.contract_precision<fp32>} : vector<8x8xf32>, vector<8x32xf32>, vector<8x32xf32> -> vector<8x32xf32>
    %c0_4 = arith.constant 0 : index
    %c0_5 = arith.constant 0 : index
    %6 = vector.load %arg3[%c0_4, %c0_5] : memref<1x32xf32, #tpu.memory_space<vmem>>, vector<1x32xf32>
    %7 = vector.broadcast %6 : vector<1x32xf32> to vector<8x32xf32>
    %8 = arith.addf %5, %7 : vector<8x32xf32>
    %cst_6 = arith.constant 0.000000e+00 : f32
    %9 = vector.broadcast %cst_6 : f32 to vector<8x32xf32>
    %10 = arith.maximumf %8, %9 : vector<8x32xf32>
    %c0_7 = arith.constant 0 : index
    %c0_8 = arith.constant 0 : index
    %11 = vector.load %arg4[%c0_7, %c0_8] : memref<32x32xf32, #tpu.memory_space<vmem>>, vector<32x32xf32>
    %cst_9 = arith.constant dense<0.000000e+00> : vector<8x32xf32>
    %12 = tpu.matmul %10, %11, %cst_9 {dimension_numbers = #tpu.dot_dimension_numbers<[1], [0], [0], [1], [0, 0, 1, 1], [], []>, precision = #tpu.contract_precision<fp32>} : vector<8x32xf32>, vector<32x32xf32>, vector<8x32xf32> -> vector<8x32xf32>
    %c0_10 = arith.constant 0 : index
    %c0_11 = arith.constant 0 : index
    %13 = vector.load %arg5[%c0_10, %c0_11] : memref<1x32xf32, #tpu.memory_space<vmem>>, vector<1x32xf32>
    %14 = vector.broadcast %13 : vector<1x32xf32> to vector<8x32xf32>
    %15 = arith.addf %12, %14 : vector<8x32xf32>
    %cst_12 = arith.constant 0.000000e+00 : f32
    %16 = vector.broadcast %cst_12 : f32 to vector<8x32xf32>
    %17 = arith.maximumf %15, %16 : vector<8x32xf32>
    %c0_13 = arith.constant 0 : index
    %c0_14 = arith.constant 0 : index
    %18 = vector.load %arg9[%c0_13, %c0_14] : memref<1x32xf32, #tpu.memory_space<vmem>>, vector<1x32xf32>
    %cst_15 = arith.constant dense<0.000000e+00> : vector<32xf32>
    %19 = vector.multi_reduction <add>, %17, %cst_15 [0] : vector<8x32xf32> to vector<32xf32>
    %20 = vector.shape_cast %19 : vector<32xf32> to vector<1x32xf32>
    %21 = arith.addf %18, %20 : vector<1x32xf32>
    %c0_16 = arith.constant 0 : index
    %c0_17 = arith.constant 0 : index
    %22 = vector.load %arg9[%c0_16, %c0_17] : memref<1x32xf32, #tpu.memory_space<vmem>>, vector<1x32xf32>
    tpu.vector_store %arg9[%c0_16, %c0_17], %21 {strides = array<i32>} : memref<1x32xf32, #tpu.memory_space<vmem>>, vector<1x32xf32>,
    %c0_i32_18 = arith.constant 0 : i32
    %23 = arith.cmpi eq, %arg0, %c0_i32_18 : i32
    %24 = arith.extui %23 : i1 to i32
    %c0_i32_19 = arith.constant 0 : i32
    %25 = arith.cmpi ne, %24, %c0_i32_19 : i32
    scf.if %25 {
      %c0_20 = arith.constant 0 : index
      %c0_21 = arith.constant 0 : index
      %26 = vector.load %arg9[%c0_20, %c0_21] : memref<1x32xf32, #tpu.memory_space<vmem>>, vector<1x32xf32>
      %cst_22 = arith.constant 1.250000e-01 : f32
      %27 = vector.broadcast %cst_22 : f32 to vector<1x32xf32>
      %28 = arith.mulf %26, %27 : vector<1x32xf32>
      %c0_23 = arith.constant 0 : index
      %c0_24 = arith.constant 0 : index
      %29 = vector.load %arg6[%c0_23, %c0_24] : memref<32x4xf32, #tpu.memory_space<vmem>>, vector<32x4xf32>
      %cst_25 = arith.constant dense<0.000000e+00> : vector<1x4xf32>
      %30 = tpu.matmul %28, %29, %cst_25 {dimension_numbers = #tpu.dot_dimension_numbers<[1], [0], [0], [1], [0, 0, 1, 1], [], []>, precision = #tpu.contract_precision<fp32>} : vector<1x32xf32>, vector<32x4xf32>, vector<1x4xf32> -> vector<1x4xf32>
      %c0_26 = arith.constant 0 : index
      %c0_27 = arith.constant 0 : index
      %31 = vector.load %arg7[%c0_26, %c0_27] : memref<1x4xf32, #tpu.memory_space<vmem>>, vector<1x4xf32>
      %32 = arith.addf %30, %31 : vector<1x4xf32>
      %c0_28 = arith.constant 0 : index
      %c0_29 = arith.constant 0 : index
      %33 = vector.load %arg8[%c0_28, %c0_29] : memref<1x4xf32, #tpu.memory_space<vmem>>, vector<1x4xf32>
      tpu.vector_store %arg8[%c0_28, %c0_29], %32 {strides = array<i32>} : memref<1x4xf32, #tpu.memory_space<vmem>>, vector<1x4xf32>,
    } else {
    }
    return
  }
  func.func @transform_0(%arg0: i32) -> (i32, i32) {
    %c0_i32 = arith.constant 0 : i32
    %c0_i32_0 = arith.constant 0 : i32
    return %arg0, %c0_i32 : i32, i32
  }
  func.func @transform_1(%arg0: i32) -> (i32, i32) {
    %c0_i32 = arith.constant 0 : i32
    %c0_i32_0 = arith.constant 0 : i32
    %c0_i32_1 = arith.constant 0 : i32
    return %c0_i32, %c0_i32_0 : i32, i32
  }
  func.func @transform_2(%arg0: i32) -> (i32, i32) {
    %c0_i32 = arith.constant 0 : i32
    %c0_i32_0 = arith.constant 0 : i32
    %c0_i32_1 = arith.constant 0 : i32
    return %c0_i32, %c0_i32_0 : i32, i32
  }
  func.func @transform_3(%arg0: i32) -> (i32, i32) {
    %c0_i32 = arith.constant 0 : i32
    %c0_i32_0 = arith.constant 0 : i32
    %c0_i32_1 = arith.constant 0 : i32
    return %c0_i32, %c0_i32_0 : i32, i32
  }
  func.func @transform_4(%arg0: i32) -> (i32, i32) {
    %c0_i32 = arith.constant 0 : i32
    %c0_i32_0 = arith.constant 0 : i32
    %c0_i32_1 = arith.constant 0 : i32
    return %c0_i32, %c0_i32_0 : i32, i32
  }
  func.func @transform_5(%arg0: i32) -> (i32, i32) {
    %c0_i32 = arith.constant 0 : i32
    %c0_i32_0 = arith.constant 0 : i32
    %c0_i32_1 = arith.constant 0 : i32
    return %c0_i32, %c0_i32_0 : i32, i32
  }
  func.func @transform_6(%arg0: i32) -> (i32, i32) {
    %c0_i32 = arith.constant 0 : i32
    %c0_i32_0 = arith.constant 0 : i32
    %c0_i32_1 = arith.constant 0 : i32
    return %c0_i32, %c0_i32_0 : i32, i32
  }
  func.func @transform_7(%arg0: i32) -> (i32, i32) {
    %c0_i32 = arith.constant 0 : i32
    %c0_i32_0 = arith.constant 0 : i32
    %c0_i32_1 = arith.constant 0 : i32
    return %c0_i32, %c0_i32_0 : i32, i32
  }
}

</mosaic_0001>

<llo_original>
// kernel: tpu_custom_call.1
$region0: #{tpu_custom_call.1}
  #allocation0 [shape = 'u32[]', space=smem, size = 0x4, offset = 0x4, fixed_abs, tag = 'smem constant byte address 0x4 - core index']
  #allocation1 [shape = 'u32[144,128]{1,0:T(1,128)}', space=vmem, size = 0x12000, scoped, tag = 'internal scratch']
  #allocation2 [shape = 'f32[1,32]{1,0:T(1,128)}', space=vmem, size = 0x200, scoped, tag = 'scratch operand']
  %s0 = inlined_call_operand.vmem [shape: f32[8,8], index: 0, kind: input, shape index: {}]
  %s1 = inlined_call_operand.hbm [shape: f32[8,32], index: 1, kind: input, shape index: {}]
  %s2 = inlined_call_operand.vmem [shape: f32[1,32], index: 2, kind: input, shape index: {}]
  %s3 = inlined_call_operand.vmem [shape: f32[32,32], index: 3, kind: input, shape index: {}]
  %s4 = inlined_call_operand.hbm [shape: f32[1,32], index: 4, kind: input, shape index: {}]
  %s5 = inlined_call_operand.vmem [shape: f32[32,4], index: 5, kind: input, shape index: {}]
  %s6 = inlined_call_operand.vmem [shape: f32[1,4], index: 6, kind: input, shape index: {}]
  %s7 = inlined_call_operand.hbm [shape: f32[1,4], index: 7, kind: output, shape index: {}]
  %s8 = sld [smem:[#allocation0]]
  $region54: #{tpu_custom_call.1} parent=0
    _
  %s10 = ssub.s32 1, %s8
  %s11 = scalar_select 0, %s10, %s8
  $region1: #{tpu_custom_call.1} parent=0
    #allocation3 [shape = 'u8[4096]{0}', space=vmem, size = 0x1000, scoped, tag = 'input window, operand 1, single buffered']
    #allocation4 [shape = 's32[1]{0}', space=sflag, size = 0x4, scoped, tag = 'scoped memory for tpu_custom_call.1']
    #allocation5 [shape = 's32[1]{0}', space=sflag, size = 0x4, scoped, tag = 'scoped memory for tpu_custom_call.1']
    #allocation6 [shape = 'u8[512]{0}', space=vmem, size = 0x400, scoped, tag = 'input window, operand 4, single buffered']
    #allocation7 [shape = 's32[1]{0}', space=sflag, size = 0x4, scoped, tag = 'scoped memory for tpu_custom_call.1']
    #allocation8 [shape = 'u8[512]{0}', space=vmem, size = 0x400, scoped, tag = 'output window, operand 0, single buffered']
    %12 = vsyncpa [#allocation4], 0
    %13 = vsyncpa [#allocation7], 0
    %14 = vsyncpa [#allocation5], 0
    // Predicated region
    $region2: #{tpu_custom_call.1} parent=1 // pred_check
      _
    $region3: #{tpu_custom_call.1} parent=1 // pred_check_branch
      %16 = sbr.rel (0) target = $region5
    $region4: #{tpu_custom_call.1} parent=1 // pred_region
      _
    $region5: #{tpu_custom_call.1} parent=1 // pred_fallthru
      _
    // Predicated region
    $region6: #{tpu_custom_call.1} parent=1 // pred_check
      _
    $region7: #{tpu_custom_call.1} parent=1 // pred_check_branch
      %18 = sbr.rel (0) target = $region9
    $region8: #{tpu_custom_call.1} parent=1 // pred_region
      %s20 = ssub.s32 128, 128
      %21 = vsyncadd [#allocation4], %s20
      %s23 = sshll.u32 [#allocation3], 4
      %s24 = int_to_ptr.vmem [resolvable:$true] %s23
      %26 = dma.hbm_to_vmem [thread:$0]  %s1, 128, %s24, [#allocation4]
    $region9: #{tpu_custom_call.1} parent=1 // pred_fallthru
      _
    // Predicated region
    $region10: #{tpu_custom_call.1} parent=1 // pred_check
      _
    $region11: #{tpu_custom_call.1} parent=1 // pred_check_branch
      %28 = sbr.rel (0) target = $region13
    $region12: #{tpu_custom_call.1} parent=1 // pred_region
      _
    $region13: #{tpu_custom_call.1} parent=1 // pred_fallthru
      _
    // Predicated region
    $region14: #{tpu_custom_call.1} parent=1 // pred_check
      _
    $region15: #{tpu_custom_call.1} parent=1 // pred_check_branch
      %30 = sbr.rel (0) target = $region17
    $region16: #{tpu_custom_call.1} parent=1 // pred_region
      _
    $region17: #{tpu_custom_call.1} parent=1 // pred_fallthru
      _
    // Predicated region
    $region18: #{tpu_custom_call.1} parent=1 // pred_check
      _
    $region19: #{tpu_custom_call.1} parent=1 // pred_check_branch
      %32 = sbr.rel (0) target = $region21
    $region20: #{tpu_custom_call.1} parent=1 // pred_region
      %s34 = ssub.s32 16, 16
      %35 = vsyncadd [#allocation7], %s34
      %s37 = sshll.u32 [#allocation6], 4
      %s38 = int_to_ptr.vmem [resolvable:$true] %s37
      %40 = dma.hbm_to_vmem [thread:$0]  %s4, 16, %s38, [#allocation7]
    $region21: #{tpu_custom_call.1} parent=1 // pred_fallthru
      _
    // Predicated region
    $region22: #{tpu_custom_call.1} parent=1 // pred_check
      _
    $region23: #{tpu_custom_call.1} parent=1 // pred_check_branch
      %42 = sbr.rel (0) target = $region25
    $region24: #{tpu_custom_call.1} parent=1 // pred_region
      _
    $region25: #{tpu_custom_call.1} parent=1 // pred_fallthru
      _
    // Predicated region
    $region26: #{tpu_custom_call.1} parent=1 // pred_check
      _
    $region27: #{tpu_custom_call.1} parent=1 // pred_check_branch
      %44 = sbr.rel (0) target = $region29
    $region28: #{tpu_custom_call.1} parent=1 // pred_region
      _
    $region29: #{tpu_custom_call.1} parent=1 // pred_fallthru
      _
    // Predicated region
    $region30: #{tpu_custom_call.1} parent=1 // pred_check
      _
    $region31: #{tpu_custom_call.1} parent=1 // pred_check_branch
      %46 = sbr.rel (0) target = $region33
    $region32: #{tpu_custom_call.1} parent=1 // pred_region
      %47 = dma.done [#allocation4], 128
    $region33: #{tpu_custom_call.1} parent=1 // pred_fallthru
      _
    // Predicated region
    $region34: #{tpu_custom_call.1} parent=1 // pred_check
      _
    $region35: #{tpu_custom_call.1} parent=1 // pred_check_branch
      %49 = sbr.rel (0) target = $region37
    $region36: #{tpu_custom_call.1} parent=1 // pred_region
      %50 = dma.done [#allocation7], 16
    $region37: #{tpu_custom_call.1} parent=1 // pred_fallthru
      _
    %p51 = scmp.eq.s32.totalorder 0, 0
    // Predicated region
    $region38: #{tpu_custom_call.1} parent=1 // pred_check
      %p52 = pneg %p51
    $region39: #{tpu_custom_call.1} parent=1 // pred_check_branch
      %54 = sbr.rel (%p52) target = $region41
    $region40: #{tpu_custom_call.1} parent=1 // pred_region
      %vm55 = vcmask 253952
      %56 = vst.msk [vmem:[#allocation2] sm:$0x1] %vm55, 0.0
    $region41: #{tpu_custom_call.1} parent=1 // pred_fallthru
      _
    %v57 = vld [vmem:[%s0] sm:$0xff]
    %v58 = vld [vmem:[#allocation3] sm:$0xff]
    %v59 = vld [vmem:[%s2] sm:$0x1]
    %v61 = vlaneseq
    %v62 = vshrl.u32 %v61, 7
    %v63 = vsub.s32 0, %v62
    %v64 = vrot.slane %v59, %v63
    %vm66 = vcmask 64512
    %v68 = vsel %vm66, %v57, 0
    %70 = vmatprep.subr.mxu0 0.0
    %71 = vmatpush1.msra.mxu0 0.0
    %72 = vmatprep.subr.mxu0 0.0
    %73 = vmatpush1.msra.mxu0 0.0
    %74 = vmatprep.subr.mxu0 0.0
    %75 = vmatpush1.msra.mxu0 0.0
    %76 = vmatprep.subr.mxu0 0.0
    %77 = vmatpush1.msra.mxu0 0.0
    %78 = vmatprep.subr.mxu0 0.0
    %79 = vmatpush1.msra.mxu0 0.0
    %80 = vmatprep.subr.mxu0 0.0
    %81 = vmatpush1.msra.mxu0 0.0
    %82 = vmatprep.subr.mxu0 0.0
    %83 = vmatpush1.msra.mxu0 0.0
    %84 = vmatprep.subr.mxu0 0.0
    %85 = vmatpush1.msra.mxu0 0.0
    %86 = vmatprep.subr.mxu0 0.0
    %87 = vmatpush1.msra.mxu0 0.0
    %88 = vmatprep.subr.mxu0 0.0
    %89 = vmatpush1.msra.mxu0 0.0
    %90 = vmatprep.subr.mxu0 0.0
    %91 = vmatpush1.msra.mxu0 0.0
    %92 = vmatprep.subr.mxu0 0.0
    %93 = vmatpush1.msra.mxu0 0.0
    %94 = vmatprep.subr.mxu0 0.0
    %95 = vmatpush1.msra.mxu0 0.0
    %96 = vmatprep.subr.mxu0 0.0
    %97 = vmatpush1.msra.mxu0 0.0
    %98 = vmatprep.subr.mxu0 0.0
    %99 = vmatpush1.msra.mxu0 0.0
    %100 = vmatprep.subr.mxu0 0.0
    %v101 = vand.u32 %v58, 4294901760
    %102 = vmatpush1.msra.mxu0 %v101
    %103 = vmatprep.subr.mxu0 0.0
    %104 = vmatpush2.msra.mxu0 0.0
    %105 = vmatprep.subr.mxu0 0.0
    %106 = vmatpush2.msra.mxu0 0.0
    %107 = vmatprep.subr.mxu0 0.0
    %108 = vmatpush2.msra.mxu0 0.0
    %109 = vmatprep.subr.mxu0 0.0
    %110 = vmatpush2.msra.mxu0 0.0
    %111 = vmatprep.subr.mxu0 0.0
    %112 = vmatpush2.msra.mxu0 0.0
    %113 = vmatprep.subr.mxu0 0.0
    %114 = vmatpush2.msra.mxu0 0.0
    %115 = vmatprep.subr.mxu0 0.0
    %116 = vmatpush2.msra.mxu0 0.0
    %117 = vmatprep.subr.mxu0 0.0
    %118 = vmatpush2.msra.mxu0 0.0
    %119 = vmatprep.subr.mxu0 0.0
    %120 = vmatpush2.msra.mxu0 0.0
    %121 = vmatprep.subr.mxu0 0.0
    %122 = vmatpush2.msra.mxu0 0.0
    %123 = vmatprep.subr.mxu0 0.0
    %124 = vmatpush2.msra.mxu0 0.0
    %125 = vmatprep.subr.mxu0 0.0
    %126 = vmatpush2.msra.mxu0 0.0
    %127 = vmatprep.subr.mxu0 0.0
    %128 = vmatpush2.msra.mxu0 0.0
    %129 = vmatprep.subr.mxu0 0.0
    %130 = vmatpush2.msra.mxu0 0.0
    %131 = vmatprep.subr.mxu0 0.0
    %132 = vmatpush2.msra.mxu0 0.0
    %133 = vmatprep.subr.mxu0 0.0
    %134 = vmatpush2.msra.mxu0 0.0
    %135 = vmatprep.mubr.f32.mxu0 0.0
    %v136 = vand.u32 %v68, 4294901760
    %v137 = vsub.f32 %v68, %v136
    %v138 = vand.u32 %v137, 4294901760
    %v139 = vsub.f32 %v137, %v138
    %v140 = vand.u32 %v139, 4294901760
    %141 = vmatmul.mubr.f32.gmra.mxu0 %v140
    %v142 = vpop.f32.mrf.mxu0
    %v143 = vadd.f32 %v64, %v142
    %v144 = vpop.f32.mrf.mxu0
    %145 = vdwg.mxu0
    %146 = vmatprep.subr.mxu0 0.0
    %147 = vmatpush1.msra.mxu0 0.0
    %148 = vmatprep.subr.mxu0 0.0
    %149 = vmatpush1.msra.mxu0 0.0
    %150 = vmatprep.subr.mxu0 0.0
    %151 = vmatpush1.msra.mxu0 0.0
    %152 = vmatprep.subr.mxu0 0.0
    %153 = vmatpush1.msra.mxu0 0.0
    %154 = vmatprep.subr.mxu0 0.0
    %155 = vmatpush1.msra.mxu0 0.0
    %156 = vmatprep.subr.mxu0 0.0
    %157 = vmatpush1.msra.mxu0 0.0
    %158 = vmatprep.subr.mxu0 0.0
    %159 = vmatpush1.msra.mxu0 0.0
    %160 = vmatprep.subr.mxu0 0.0
    %161 = vmatpush1.msra.mxu0 0.0
    %162 = vmatprep.subr.mxu0 0.0
    %163 = vmatpush1.msra.mxu0 0.0
    %164 = vmatprep.subr.mxu0 0.0
    %165 = vmatpush1.msra.mxu0 0.0
    %166 = vmatprep.subr.mxu0 0.0
    %167 = vmatpush1.msra.mxu0 0.0
    %168 = vmatprep.subr.mxu0 0.0
    %169 = vmatpush1.msra.mxu0 0.0
    %170 = vmatprep.subr.mxu0 0.0
    %171 = vmatpush1.msra.mxu0 0.0
    %172 = vmatprep.subr.mxu0 0.0
    %173 = vmatpush1.msra.mxu0 0.0
    %174 = vmatprep.subr.mxu0 0.0
    %175 = vmatpush1.msra.mxu0 0.0
    %176 = vmatprep.subr.mxu0 0.0
    %v177 = vand.u32 %v58, 4294901760
    %v178 = vsub.f32 %v58, %v177
    %v179 = vand.u32 %v178, 4294901760
    %v180 = vsub.f32 %v178, %v179
    %v181 = vand.u32 %v180, 4294901760
    %182 = vmatpush1.msra.mxu0 %v181
    %183 = vmatprep.subr.mxu0 0.0
    %184 = vmatpush2.msra.mxu0 0.0
    %185 = vmatprep.subr.mxu0 0.0
    %186 = vmatpush2.msra.mxu0 0.0
    %187 = vmatprep.subr.mxu0 0.0
    %188 = vmatpush2.msra.mxu0 0.0
    %189 = vmatprep.subr.mxu0 0.0
    %190 = vmatpush2.msra.mxu0 0.0
    %191 = vmatprep.subr.mxu0 0.0
    %192 = vmatpush2.msra.mxu0 0.0
    %193 = vmatprep.subr.mxu0 0.0
    %194 = vmatpush2.msra.mxu0 0.0
    %195 = vmatprep.subr.mxu0 0.0
    %196 = vmatpush2.msra.mxu0 0.0
    %197 = vmatprep.subr.mxu0 0.0
    %198 = vmatpush2.msra.mxu0 0.0
    %199 = vmatprep.subr.mxu0 0.0
    %200 = vmatpush2.msra.mxu0 0.0
    %201 = vmatprep.subr.mxu0 0.0
    %202 = vmatpush2.msra.mxu0 0.0
    %203 = vmatprep.subr.mxu0 0.0
    %204 = vmatpush2.msra.mxu0 0.0
    %205 = vmatprep.subr.mxu0 0.0
    %206 = vmatpush2.msra.mxu0 0.0
    %207 = vmatprep.subr.mxu0 0.0
    %208 = vmatpush2.msra.mxu0 0.0
    %209 = vmatprep.subr.mxu0 0.0
    %210 = vmatpush2.msra.mxu0 0.0
    %211 = vmatprep.subr.mxu0 0.0
    %212 = vmatpush2.msra.mxu0 0.0
    %213 = vmatprep.subr.mxu0 0.0
    %214 = vmatpush2.msra.mxu0 0.0
    %215 = vmatprep.mubr.f32.mxu0 0.0
    %v216 = vand.u32 %v68, 4294901760
    %217 = vmatmul.mubr.f32.gmra.mxu0 %v216
    %v218 = vpop.f32.mrf.mxu0
    %v219 = vadd.f32 %v143, %v218
    %v220 = vpop.f32.mrf.mxu0
    %221 = vdwg.mxu0
    %222 = vmatprep.subr.mxu0 0.0
    %223 = vmatpush1.msra.mxu0 0.0
    %224 = vmatprep.subr.mxu0 0.0
    %225 = vmatpush1.msra.mxu0 0.0
    %226 = vmatprep.subr.mxu0 0.0
    %227 = vmatpush1.msra.mxu0 0.0
    %228 = vmatprep.subr.mxu0 0.0
    %229 = vmatpush1.msra.mxu0 0.0
    %230 = vmatprep.subr.mxu0 0.0
    %231 = vmatpush1.msra.mxu0 0.0
    %232 = vmatprep.subr.mxu0 0.0
    %233 = vmatpush1.msra.mxu0 0.0
    %234 = vmatprep.subr.mxu0 0.0
    %235 = vmatpush1.msra.mxu0 0.0
    %236 = vmatprep.subr.mxu0 0.0
    %237 = vmatpush1.msra.mxu0 0.0
    %238 = vmatprep.subr.mxu0 0.0
    %239 = vmatpush1.msra.mxu0 0.0
    %240 = vmatprep.subr.mxu0 0.0
    %241 = vmatpush1.msra.mxu0 0.0
    %242 = vmatprep.subr.mxu0 0.0
    %243 = vmatpush1.msra.mxu0 0.0
    %244 = vmatprep.subr.mxu0 0.0
    %245 = vmatpush1.msra.mxu0 0.0
    %246 = vmatprep.subr.mxu0 0.0
    %247 = vmatpush1.msra.mxu0 0.0
    %248 = vmatprep.subr.mxu0 0.0
    %249 = vmatpush1.msra.mxu0 0.0
    %250 = vmatprep.subr.mxu0 0.0
    %251 = vmatpush1.msra.mxu0 0.0
    %252 = vmatprep.subr.mxu0 0.0
    %v253 = vand.u32 %v58, 4294901760
    %v254 = vsub.f32 %v58, %v253
    %255 = vmatpush1.msra.mxu0 %v254
    %256 = vmatprep.subr.mxu0 0.0
    %257 = vmatpush2.msra.mxu0 0.0
    %258 = vmatprep.subr.mxu0 0.0
    %259 = vmatpush2.msra.mxu0 0.0
    %260 = vmatprep.subr.mxu0 0.0
    %261 = vmatpush2.msra.mxu0 0.0
    %262 = vmatprep.subr.mxu0 0.0
    %263 = vmatpush2.msra.mxu0 0.0
    %264 = vmatprep.subr.mxu0 0.0
    %265 = vmatpush2.msra.mxu0 0.0
    %266 = vmatprep.subr.mxu0 0.0
    %267 = vmatpush2.msra.mxu0 0.0
    %268 = vmatprep.subr.mxu0 0.0
    %269 = vmatpush2.msra.mxu0 0.0
    %270 = vmatprep.subr.mxu0 0.0
    %271 = vmatpush2.msra.mxu0 0.0
    %272 = vmatprep.subr.mxu0 0.0
    %273 = vmatpush2.msra.mxu0 0.0
    %274 = vmatprep.subr.mxu0 0.0
    %275 = vmatpush2.msra.mxu0 0.0
    %276 = vmatprep.subr.mxu0 0.0
    %277 = vmatpush2.msra.mxu0 0.0
    %278 = vmatprep.subr.mxu0 0.0
    %279 = vmatpush2.msra.mxu0 0.0
    %280 = vmatprep.subr.mxu0 0.0
    %281 = vmatpush2.msra.mxu0 0.0
    %282 = vmatprep.subr.mxu0 0.0
    %283 = vmatpush2.msra.mxu0 0.0
    %284 = vmatprep.subr.mxu0 0.0
    %285 = vmatpush2.msra.mxu0 0.0
    %286 = vmatprep.subr.mxu0 0.0
    %287 = vmatpush2.msra.mxu0 0.0
    %288 = vmatprep.mubr.f32.mxu0 0.0
    %v289 = vand.u32 %v68, 4294901760
    %v290 = vsub.f32 %v68, %v289
    %291 = vmatmul.mubr.f32.gmra.mxu0 %v290
    %v292 = vpop.f32.mrf.mxu0
    %v293 = vadd.f32 %v219, %v292
    %v294 = vpop.f32.mrf.mxu0
    %295 = vdwg.mxu0
    %296 = vmatprep.subr.mxu0 0.0
    %297 = vmatpush1.msra.mxu0 0.0
    %298 = vmatprep.subr.mxu0 0.0
    %299 = vmatpush1.msra.mxu0 0.0
    %300 = vmatprep.subr.mxu0 0.0
    %301 = vmatpush1.msra.mxu0 0.0
    %302 = vmatprep.subr.mxu0 0.0
    %303 = vmatpush1.msra.mxu0 0.0
    %304 = vmatprep.subr.mxu0 0.0
    %305 = vmatpush1.msra.mxu0 0.0
    %306 = vmatprep.subr.mxu0 0.0
    %307 = vmatpush1.msra.mxu0 0.0
    %308 = vmatprep.subr.mxu0 0.0
    %309 = vmatpush1.msra.mxu0 0.0
    %310 = vmatprep.subr.mxu0 0.0
    %311 = vmatpush1.msra.mxu0 0.0
    %312 = vmatprep.subr.mxu0 0.0
    %313 = vmatpush1.msra.mxu0 0.0
    %314 = vmatprep.subr.mxu0 0.0
    %315 = vmatpush1.msra.mxu0 0.0
    %316 = vmatprep.subr.mxu0 0.0
    %317 = vmatpush1.msra.mxu0 0.0
    %318 = vmatprep.subr.mxu0 0.0
    %319 = vmatpush1.msra.mxu0 0.0
    %320 = vmatprep.subr.mxu0 0.0
    %321 = vmatpush1.msra.mxu0 0.0
    %322 = vmatprep.subr.mxu0 0.0
    %323 = vmatpush1.msra.mxu0 0.0
    %324 = vmatprep.subr.mxu0 0.0
    %325 = vmatpush1.msra.mxu0 0.0
    %326 = vmatprep.subr.mxu0 0.0
    %v327 = vand.u32 %v58, 4294901760
    %328 = vmatpush1.msra.mxu0 %v327
    %329 = vmatprep.subr.mxu0 0.0
    %330 = vmatpush2.msra.mxu0 0.0
    %331 = vmatprep.subr.mxu0 0.0
    %332 = vmatpush2.msra.mxu0 0.0
    %333 = vmatprep.subr.mxu0 0.0
    %334 = vmatpush2.msra.mxu0 0.0
    %335 = vmatprep.subr.mxu0 0.0
    %336 = vmatpush2.msra.mxu0 0.0
    %337 = vmatprep.subr.mxu0 0.0
    %338 = vmatpush2.msra.mxu0 0.0
    %339 = vmatprep.subr.mxu0 0.0
    %340 = vmatpush2.msra.mxu0 0.0
    %341 = vmatprep.subr.mxu0 0.0
    %342 = vmatpush2.msra.mxu0 0.0
    %343 = vmatprep.subr.mxu0 0.0
    %344 = vmatpush2.msra.mxu0 0.0
    %345 = vmatprep.subr.mxu0 0.0
    %346 = vmatpush2.msra.mxu0 0.0
    %347 = vmatprep.subr.mxu0 0.0
    %348 = vmatpush2.msra.mxu0 0.0
    %349 = vmatprep.subr.mxu0 0.0
    %350 = vmatpush2.msra.mxu0 0.0
    %351 = vmatprep.subr.mxu0 0.0
    %352 = vmatpush2.msra.mxu0 0.0
    %353 = vmatprep.subr.mxu0 0.0
    %354 = vmatpush2.msra.mxu0 0.0
    %355 = vmatprep.subr.mxu0 0.0
    %356 = vmatpush2.msra.mxu0 0.0
    %357 = vmatprep.subr.mxu0 0.0
    %358 = vmatpush2.msra.mxu0 0.0
    %359 = vmatprep.subr.mxu0 0.0
    %360 = vmatpush2.msra.mxu0 0.0
    %361 = vmatprep.mubr.f32.mxu0 0.0
    %v362 = vand.u32 %v68, 4294901760
    %v363 = vsub.f32 %v68, %v362
    %v364 = vand.u32 %v363, 4294901760
    %365 = vmatmul.mubr.f32.gmra.mxu0 %v364
    %v366 = vpop.f32.mrf.mxu0
    %v367 = vadd.f32 %v293, %v366
    %v368 = vpop.f32.mrf.mxu0
    %369 = vdwg.mxu0
    %370 = vmatprep.subr.mxu0 0.0
    %371 = vmatpush1.msra.mxu0 0.0
    %372 = vmatprep.subr.mxu0 0.0
    %373 = vmatpush1.msra.mxu0 0.0
    %374 = vmatprep.subr.mxu0 0.0
    %375 = vmatpush1.msra.mxu0 0.0
    %376 = vmatprep.subr.mxu0 0.0
    %377 = vmatpush1.msra.mxu0 0.0
    %378 = vmatprep.subr.mxu0 0.0
    %379 = vmatpush1.msra.mxu0 0.0
    %380 = vmatprep.subr.mxu0 0.0
    %381 = vmatpush1.msra.mxu0 0.0
    %382 = vmatprep.subr.mxu0 0.0
    %383 = vmatpush1.msra.mxu0 0.0
    %384 = vmatprep.subr.mxu0 0.0
    %385 = vmatpush1.msra.mxu0 0.0
    %386 = vmatprep.subr.mxu0 0.0
    %387 = vmatpush1.msra.mxu0 0.0
    %388 = vmatprep.subr.mxu0 0.0
    %389 = vmatpush1.msra.mxu0 0.0
    %390 = vmatprep.subr.mxu0 0.0
    %391 = vmatpush1.msra.mxu0 0.0
    %392 = vmatprep.subr.mxu0 0.0
    %393 = vmatpush1.msra.mxu0 0.0
    %394 = vmatprep.subr.mxu0 0.0
    %395 = vmatpush1.msra.mxu0 0.0
    %396 = vmatprep.subr.mxu0 0.0
    %397 = vmatpush1.msra.mxu0 0.0
    %398 = vmatprep.subr.mxu0 0.0
    %399 = vmatpush1.msra.mxu0 0.0
    %400 = vmatprep.subr.mxu0 0.0
    %v401 = vand.u32 %v58, 4294901760
    %v402 = vsub.f32 %v58, %v401
    %v403 = vand.u32 %v402, 4294901760
    %404 = vmatpush1.msra.mxu0 %v403
    %405 = vmatprep.subr.mxu0 0.0
    %406 = vmatpush2.msra.mxu0 0.0
    %407 = vmatprep.subr.mxu0 0.0
    %408 = vmatpush2.msra.mxu0 0.0
    %409 = vmatprep.subr.mxu0 0.0
    %410 = vmatpush2.msra.mxu0 0.0
    %411 = vmatprep.subr.mxu0 0.0
    %412 = vmatpush2.msra.mxu0 0.0
    %413 = vmatprep.subr.mxu0 0.0
    %414 = vmatpush2.msra.mxu0 0.0
    %415 = vmatprep.subr.mxu0 0.0
    %416 = vmatpush2.msra.mxu0 0.0
    %417 = vmatprep.subr.mxu0 0.0
    %418 = vmatpush2.msra.mxu0 0.0
    %419 = vmatprep.subr.mxu0 0.0
    %420 = vmatpush2.msra.mxu0 0.0
    %421 = vmatprep.subr.mxu0 0.0
    %422 = vmatpush2.msra.mxu0 0.0
    %423 = vmatprep.subr.mxu0 0.0
    %424 = vmatpush2.msra.mxu0 0.0
    %425 = vmatprep.subr.mxu0 0.0
    %426 = vmatpush2.msra.mxu0 0.0
    %427 = vmatprep.subr.mxu0 0.0
    %428 = vmatpush2.msra.mxu0 0.0
    %429 = vmatprep.subr.mxu0 0.0
    %430 = vmatpush2.msra.mxu0 0.0
    %431 = vmatprep.subr.mxu0 0.0
    %432 = vmatpush2.msra.mxu0 0.0
    %433 = vmatprep.subr.mxu0 0.0
    %434 = vmatpush2.msra.mxu0 0.0
    %435 = vmatprep.subr.mxu0 0.0
    %436 = vmatpush2.msra.mxu0 0.0
    %437 = vmatprep.mubr.f32.mxu0 0.0
    %v438 = vand.u32 %v68, 4294901760
    %439 = vmatmul.mubr.f32.gmra.mxu0 %v438
    %v440 = vpop.f32.mrf.mxu0
    %v441 = vadd.f32 %v367, %v440
    %v442 = vpop.f32.mrf.mxu0
    %443 = vdwg.mxu0
    %444 = vmatprep.subr.mxu0 0.0
    %445 = vmatpush1.msra.mxu0 0.0
    %446 = vmatprep.subr.mxu0 0.0
    %447 = vmatpush1.msra.mxu0 0.0
    %448 = vmatprep.subr.mxu0 0.0
    %449 = vmatpush1.msra.mxu0 0.0
    %450 = vmatprep.subr.mxu0 0.0
    %451 = vmatpush1.msra.mxu0 0.0
    %452 = vmatprep.subr.mxu0 0.0
    %453 = vmatpush1.msra.mxu0 0.0
    %454 = vmatprep.subr.mxu0 0.0
    %455 = vmatpush1.msra.mxu0 0.0
    %456 = vmatprep.subr.mxu0 0.0
    %457 = vmatpush1.msra.mxu0 0.0
    %458 = vmatprep.subr.mxu0 0.0
    %459 = vmatpush1.msra.mxu0 0.0
    %460 = vmatprep.subr.mxu0 0.0
    %461 = vmatpush1.msra.mxu0 0.0
    %462 = vmatprep.subr.mxu0 0.0
    %463 = vmatpush1.msra.mxu0 0.0
    %464 = vmatprep.subr.mxu0 0.0
    %465 = vmatpush1.msra.mxu0 0.0
    %466 = vmatprep.subr.mxu0 0.0
    %467 = vmatpush1.msra.mxu0 0.0
    %468 = vmatprep.subr.mxu0 0.0
    %469 = vmatpush1.msra.mxu0 0.0
    %470 = vmatprep.subr.mxu0 0.0
    %471 = vmatpush1.msra.mxu0 0.0
    %472 = vmatprep.subr.mxu0 0.0
    %473 = vmatpush1.msra.mxu0 0.0
    %474 = vmatprep.subr.mxu0 0.0
    %v475 = vand.u32 %v58, 4294901760
    %476 = vmatpush1.msra.mxu0 %v475
    %477 = vmatprep.subr.mxu0 0.0
    %478 = vmatpush2.msra.mxu0 0.0
    %479 = vmatprep.subr.mxu0 0.0
    %480 = vmatpush2.msra.mxu0 0.0
    %481 = vmatprep.subr.mxu0 0.0
    %482 = vmatpush2.msra.mxu0 0.0
    %483 = vmatprep.subr.mxu0 0.0
    %484 = vmatpush2.msra.mxu0 0.0
    %485 = vmatprep.subr.mxu0 0.0
    %486 = vmatpush2.msra.mxu0 0.0
    %487 = vmatprep.subr.mxu0 0.0
    %488 = vmatpush2.msra.mxu0 0.0
    %489 = vmatprep.subr.mxu0 0.0
    %490 = vmatpush2.msra.mxu0 0.0
    %491 = vmatprep.subr.mxu0 0.0
    %492 = vmatpush2.msra.mxu0 0.0
    %493 = vmatprep.subr.mxu0 0.0
    %494 = vmatpush2.msra.mxu0 0.0
    %495 = vmatprep.subr.mxu0 0.0
    %496 = vmatpush2.msra.mxu0 0.0
    %497 = vmatprep.subr.mxu0 0.0
    %498 = vmatpush2.msra.mxu0 0.0
    %499 = vmatprep.subr.mxu0 0.0
    %500 = vmatpush2.msra.mxu0 0.0
    %501 = vmatprep.subr.mxu0 0.0
    %502 = vmatpush2.msra.mxu0 0.0
    %503 = vmatprep.subr.mxu0 0.0
    %504 = vmatpush2.msra.mxu0 0.0
    %505 = vmatprep.subr.mxu0 0.0
    %506 = vmatpush2.msra.mxu0 0.0
    %507 = vmatprep.subr.mxu0 0.0
    %508 = vmatpush2.msra.mxu0 0.0
    %509 = vmatprep.mubr.f32.mxu0 0.0
    %v510 = vand.u32 %v68, 4294901760
    %511 = vmatmul.mubr.f32.gmra.mxu0 %v510
    %v512 = vpop.f32.mrf.mxu0
    %v513 = vadd.f32 %v441, %v512
    %v514 = vpop.f32.mrf.mxu0
    %515 = vdwg.mxu0
    %v516 = vmax.f32 %v513, 0.0
    %v517 = vld [vmem:[%s3] sm:$0xff]
    %v518 = vld [vmem:[%s3 + $0x8] sm:$0xff]
    %v519 = vld [vmem:[%s3 + $0x10] sm:$0xff]
    %v520 = vld [vmem:[%s3 + $0x18] sm:$0xff]
    %v521 = vld [vmem:[#allocation6] sm:$0x1]
    %v523 = vlaneseq
    %v524 = vshrl.u32 %v523, 7
    %v525 = vsub.s32 0, %v524
    %v526 = vrot.slane %v521, %v525
    %vm528 = vcmask 261120
    %v530 = vsel %vm528, %v516, 0
    %532 = vmatprep.subr.mxu0 0.0
    %533 = vmatpush1.msra.mxu0 0.0
    %534 = vmatprep.subr.mxu0 0.0
    %535 = vmatpush1.msra.mxu0 0.0
    %536 = vmatprep.subr.mxu0 0.0
    %537 = vmatpush1.msra.mxu0 0.0
    %538 = vmatprep.subr.mxu0 0.0
    %539 = vmatpush1.msra.mxu0 0.0
    %540 = vmatprep.subr.mxu0 0.0
    %541 = vmatpush1.msra.mxu0 0.0
    %542 = vmatprep.subr.mxu0 0.0
    %543 = vmatpush1.msra.mxu0 0.0
    %544 = vmatprep.subr.mxu0 0.0
    %545 = vmatpush1.msra.mxu0 0.0
    %546 = vmatprep.subr.mxu0 0.0
    %547 = vmatpush1.msra.mxu0 0.0
    %548 = vmatprep.subr.mxu0 0.0
    %549 = vmatpush1.msra.mxu0 0.0
    %550 = vmatprep.subr.mxu0 0.0
    %551 = vmatpush1.msra.mxu0 0.0
    %552 = vmatprep.subr.mxu0 0.0
    %553 = vmatpush1.msra.mxu0 0.0
    %554 = vmatprep.subr.mxu0 0.0
    %555 = vmatpush1.msra.mxu0 0.0
    %556 = vmatprep.subr.mxu0 0.0
    %v557 = vand.u32 %v520, 4294901760
    %558 = vmatpush1.msra.mxu0 %v557
    %559 = vmatprep.subr.mxu0 0.0
    %v560 = vand.u32 %v519, 4294901760
    %561 = vmatpush1.msra.mxu0 %v560
    %562 = vmatprep.subr.mxu0 0.0
    %v563 = vand.u32 %v518, 4294901760
    %564 = vmatpush1.msra.mxu0 %v563
    %565 = vmatprep.subr.mxu0 0.0
    %v566 = vand.u32 %v517, 4294901760
    %567 = vmatpush1.msra.mxu0 %v566
    %568 = vmatprep.subr.mxu0 0.0
    %569 = vmatpush2.msra.mxu0 0.0
    %570 = vmatprep.subr.mxu0 0.0
    %571 = vmatpush2.msra.mxu0 0.0
    %572 = vmatprep.subr.mxu0 0.0
    %573 = vmatpush2.msra.mxu0 0.0
    %574 = vmatprep.subr.mxu0 0.0
    %575 = vmatpush2.msra.mxu0 0.0
    %576 = vmatprep.subr.mxu0 0.0
    %577 = vmatpush2.msra.mxu0 0.0
    %578 = vmatprep.subr.mxu0 0.0
    %579 = vmatpush2.msra.mxu0 0.0
    %580 = vmatprep.subr.mxu0 0.0
    %581 = vmatpush2.msra.mxu0 0.0
    %582 = vmatprep.subr.mxu0 0.0
    %583 = vmatpush2.msra.mxu0 0.0
    %584 = vmatprep.subr.mxu0 0.0
    %585 = vmatpush2.msra.mxu0 0.0
    %586 = vmatprep.subr.mxu0 0.0
    %587 = vmatpush2.msra.mxu0 0.0
    %588 = vmatprep.subr.mxu0 0.0
    %589 = vmatpush2.msra.mxu0 0.0
    %590 = vmatprep.subr.mxu0 0.0
    %591 = vmatpush2.msra.mxu0 0.0
    %592 = vmatprep.subr.mxu0 0.0
    %593 = vmatpush2.msra.mxu0 0.0
    %594 = vmatprep.subr.mxu0 0.0
    %595 = vmatpush2.msra.mxu0 0.0
    %596 = vmatprep.subr.mxu0 0.0
    %597 = vmatpush2.msra.mxu0 0.0
    %598 = vmatprep.subr.mxu0 0.0
    %599 = vmatpush2.msra.mxu0 0.0
    %600 = vmatprep.mubr.f32.mxu0 0.0
    %v601 = vand.u32 %v530, 4294901760
    %v602 = vsub.f32 %v530, %v601
    %v603 = vand.u32 %v602, 4294901760
    %v604 = vsub.f32 %v602, %v603
    %v605 = vand.u32 %v604, 4294901760
    %606 = vmatmul.mubr.f32.gmra.mxu0 %v605
    %v607 = vpop.f32.mrf.mxu0
    %v608 = vadd.f32 %v526, %v607
    %v609 = vpop.f32.mrf.mxu0
    %610 = vdwg.mxu0
    %611 = vmatprep.subr.mxu0 0.0
    %612 = vmatpush1.msra.mxu0 0.0
    %613 = vmatprep.subr.mxu0 0.0
    %614 = vmatpush1.msra.mxu0 0.0
    %615 = vmatprep.subr.mxu0 0.0
    %616 = vmatpush1.msra.mxu0 0.0
    %617 = vmatprep.subr.mxu0 0.0
    %618 = vmatpush1.msra.mxu0 0.0
    %619 = vmatprep.subr.mxu0 0.0
    %620 = vmatpush1.msra.mxu0 0.0
    %621 = vmatprep.subr.mxu0 0.0
    %622 = vmatpush1.msra.mxu0 0.0
    %623 = vmatprep.subr.mxu0 0.0
    %624 = vmatpush1.msra.mxu0 0.0
    %625 = vmatprep.subr.mxu0 0.0
    %626 = vmatpush1.msra.mxu0 0.0
    %627 = vmatprep.subr.mxu0 0.0
    %628 = vmatpush1.msra.mxu0 0.0
    %629 = vmatprep.subr.mxu0 0.0
    %630 = vmatpush1.msra.mxu0 0.0
    %631 = vmatprep.subr.mxu0 0.0
    %632 = vmatpush1.msra.mxu0 0.0
    %633 = vmatprep.subr.mxu0 0.0
    %634 = vmatpush1.msra.mxu0 0.0
    %635 = vmatprep.subr.mxu0 0.0
    %v636 = vand.u32 %v520, 4294901760
    %v637 = vsub.f32 %v520, %v636
    %v638 = vand.u32 %v637, 4294901760
    %v639 = vsub.f32 %v637, %v638
    %v640 = vand.u32 %v639, 4294901760
    %641 = vmatpush1.msra.mxu0 %v640
    %642 = vmatprep.subr.mxu0 0.0
    %v643 = vand.u32 %v519, 4294901760
    %v644 = vsub.f32 %v519, %v643
    %v645 = vand.u32 %v644, 4294901760
    %v646 = vsub.f32 %v644, %v645
    %v647 = vand.u32 %v646, 4294901760
    %648 = vmatpush1.msra.mxu0 %v647
    %649 = vmatprep.subr.mxu0 0.0
    %v650 = vand.u32 %v518, 4294901760
    %v651 = vsub.f32 %v518, %v650
    %v652 = vand.u32 %v651, 4294901760
    %v653 = vsub.f32 %v651, %v652
    %v654 = vand.u32 %v653, 4294901760
    %655 = vmatpush1.msra.mxu0 %v654
    %656 = vmatprep.subr.mxu0 0.0
    %v657 = vand.u32 %v517, 4294901760
    %v658 = vsub.f32 %v517, %v657
    %v659 = vand.u32 %v658, 4294901760
    %v660 = vsub.f32 %v658, %v659
    %v661 = vand.u32 %v660, 4294901760
    %662 = vmatpush1.msra.mxu0 %v661
    %663 = vmatprep.subr.mxu0 0.0
    %664 = vmatpush2.msra.mxu0 0.0
    %665 = vmatprep.subr.mxu0 0.0
    %666 = vmatpush2.msra.mxu0 0.0
    %667 = vmatprep.subr.mxu0 0.0
    %668 = vmatpush2.msra.mxu0 0.0
    %669 = vmatprep.subr.mxu0 0.0
    %670 = vmatpush2.msra.mxu0 0.0
    %671 = vmatprep.subr.mxu0 0.0
    %672 = vmatpush2.msra.mxu0 0.0
    %673 = vmatprep.subr.mxu0 0.0
    %674 = vmatpush2.msra.mxu0 0.0
    %675 = vmatprep.subr.mxu0 0.0
    %676 = vmatpush2.msra.mxu0 0.0
    %677 = vmatprep.subr.mxu0 0.0
    %678 = vmatpush2.msra.mxu0 0.0
    %679 = vmatprep.subr.mxu0 0.0
    %680 = vmatpush2.msra.mxu0 0.0
    %681 = vmatprep.subr.mxu0 0.0
    %682 = vmatpush2.msra.mxu0 0.0
    %683 = vmatprep.subr.mxu0 0.0
    %684 = vmatpush2.msra.mxu0 0.0
    %685 = vmatprep.subr.mxu0 0.0
    %686 = vmatpush2.msra.mxu0 0.0
    %687 = vmatprep.subr.mxu0 0.0
    %688 = vmatpush2.msra.mxu0 0.0
    %689 = vmatprep.subr.mxu0 0.0
    %690 = vmatpush2.msra.mxu0 0.0
    %691 = vmatprep.subr.mxu0 0.0
    %692 = vmatpush2.msra.mxu0 0.0
    %693 = vmatprep.subr.mxu0 0.0
    %694 = vmatpush2.msra.mxu0 0.0
    %695 = vmatprep.mubr.f32.mxu0 0.0
    %v696 = vand.u32 %v530, 4294901760
    %697 = vmatmul.mubr.f32.gmra.mxu0 %v696
    %v698 = vpop.f32.mrf.mxu0
    %v699 = vadd.f32 %v608, %v698
    %v700 = vpop.f32.mrf.mxu0
    %701 = vdwg.mxu0
    %702 = vmatprep.subr.mxu0 0.0
    %703 = vmatpush1.msra.mxu0 0.0
    %704 = vmatprep.subr.mxu0 0.0
    %705 = vmatpush1.msra.mxu0 0.0
    %706 = vmatprep.subr.mxu0 0.0
    %707 = vmatpush1.msra.mxu0 0.0
    %708 = vmatprep.subr.mxu0 0.0
    %709 = vmatpush1.msra.mxu0 0.0
    %710 = vmatprep.subr.mxu0 0.0
    %711 = vmatpush1.msra.mxu0 0.0
    %712 = vmatprep.subr.mxu0 0.0
    %713 = vmatpush1.msra.mxu0 0.0
    %714 = vmatprep.subr.mxu0 0.0
    %715 = vmatpush1.msra.mxu0 0.0
    %716 = vmatprep.subr.mxu0 0.0
    %717 = vmatpush1.msra.mxu0 0.0
    %718 = vmatprep.subr.mxu0 0.0
    %719 = vmatpush1.msra.mxu0 0.0
    %720 = vmatprep.subr.mxu0 0.0
    %721 = vmatpush1.msra.mxu0 0.0
    %722 = vmatprep.subr.mxu0 0.0
    %723 = vmatpush1.msra.mxu0 0.0
    %724 = vmatprep.subr.mxu0 0.0
    %725 = vmatpush1.msra.mxu0 0.0
    %726 = vmatprep.subr.mxu0 0.0
    %v727 = vand.u32 %v520, 4294901760
    %v728 = vsub.f32 %v520, %v727
    %729 = vmatpush1.msra.mxu0 %v728
    %730 = vmatprep.subr.mxu0 0.0
    %v731 = vand.u32 %v519, 4294901760
    %v732 = vsub.f32 %v519, %v731
    %733 = vmatpush1.msra.mxu0 %v732
    %734 = vmatprep.subr.mxu0 0.0
    %v735 = vand.u32 %v518, 4294901760
    %v736 = vsub.f32 %v518, %v735
    %737 = vmatpush1.msra.mxu0 %v736
    %738 = vmatprep.subr.mxu0 0.0
    %v739 = vand.u32 %v517, 4294901760
    %v740 = vsub.f32 %v517, %v739
    %741 = vmatpush1.msra.mxu0 %v740
    %742 = vmatprep.subr.mxu0 0.0
    %743 = vmatpush2.msra.mxu0 0.0
    %744 = vmatprep.subr.mxu0 0.0
    %745 = vmatpush2.msra.mxu0 0.0
    %746 = vmatprep.subr.mxu0 0.0
    %747 = vmatpush2.msra.mxu0 0.0
    %748 = vmatprep.subr.mxu0 0.0
    %749 = vmatpush2.msra.mxu0 0.0
    %750 = vmatprep.subr.mxu0 0.0
    %751 = vmatpush2.msra.mxu0 0.0
    %752 = vmatprep.subr.mxu0 0.0
    %753 = vmatpush2.msra.mxu0 0.0
    %754 = vmatprep.subr.mxu0 0.0
    %755 = vmatpush2.msra.mxu0 0.0
    %756 = vmatprep.subr.mxu0 0.0
    %757 = vmatpush2.msra.mxu0 0.0
    %758 = vmatprep.subr.mxu0 0.0
    %759 = vmatpush2.msra.mxu0 0.0
    %760 = vmatprep.subr.mxu0 0.0
    %761 = vmatpush2.msra.mxu0 0.0
    %762 = vmatprep.subr.mxu0 0.0
    %763 = vmatpush2.msra.mxu0 0.0
    %764 = vmatprep.subr.mxu0 0.0
    %765 = vmatpush2.msra.mxu0 0.0
    %766 = vmatprep.subr.mxu0 0.0
    %767 = vmatpush2.msra.mxu0 0.0
    %768 = vmatprep.subr.mxu0 0.0
    %769 = vmatpush2.msra.mxu0 0.0
    %770 = vmatprep.subr.mxu0 0.0
    %771 = vmatpush2.msra.mxu0 0.0
    %772 = vmatprep.subr.mxu0 0.0
    %773 = vmatpush2.msra.mxu0 0.0
    %774 = vmatprep.mubr.f32.mxu0 0.0
    %v775 = vand.u32 %v530, 4294901760
    %v776 = vsub.f32 %v530, %v775
    %777 = vmatmul.mubr.f32.gmra.mxu0 %v776
    %v778 = vpop.f32.mrf.mxu0
    %v779 = vadd.f32 %v699, %v778
    %v780 = vpop.f32.mrf.mxu0
    %781 = vdwg.mxu0
    %782 = vmatprep.subr.mxu0 0.0
    %783 = vmatpush1.msra.mxu0 0.0
    %784 = vmatprep.subr.mxu0 0.0
    %785 = vmatpush1.msra.mxu0 0.0
    %786 = vmatprep.subr.mxu0 0.0
    %787 = vmatpush1.msra.mxu0 0.0
    %788 = vmatprep.subr.mxu0 0.0
    %789 = vmatpush1.msra.mxu0 0.0
    %790 = vmatprep.subr.mxu0 0.0
    %791 = vmatpush1.msra.mxu0 0.0
    %792 = vmatprep.subr.mxu0 0.0
    %793 = vmatpush1.msra.mxu0 0.0
    %794 = vmatprep.subr.mxu0 0.0
    %795 = vmatpush1.msra.mxu0 0.0
    %796 = vmatprep.subr.mxu0 0.0
    %797 = vmatpush1.msra.mxu0 0.0
    %798 = vmatprep.subr.mxu0 0.0
    %799 = vmatpush1.msra.mxu0 0.0
    %800 = vmatprep.subr.mxu0 0.0
    %801 = vmatpush1.msra.mxu0 0.0
    %802 = vmatprep.subr.mxu0 0.0
    %803 = vmatpush1.msra.mxu0 0.0
    %804 = vmatprep.subr.mxu0 0.0
    %805 = vmatpush1.msra.mxu0 0.0
    %806 = vmatprep.subr.mxu0 0.0
    %v807 = vand.u32 %v520, 4294901760
    %808 = vmatpush1.msra.mxu0 %v807
    %809 = vmatprep.subr.mxu0 0.0
    %v810 = vand.u32 %v519, 4294901760
    %811 = vmatpush1.msra.mxu0 %v810
    %812 = vmatprep.subr.mxu0 0.0
    %v813 = vand.u32 %v518, 4294901760
    %814 = vmatpush1.msra.mxu0 %v813
    %815 = vmatprep.subr.mxu0 0.0
    %v816 = vand.u32 %v517, 4294901760
    %817 = vmatpush1.msra.mxu0 %v816
    %818 = vmatprep.subr.mxu0 0.0
    %819 = vmatpush2.msra.mxu0 0.0
    %820 = vmatprep.subr.mxu0 0.0
    %821 = vmatpush2.msra.mxu0 0.0
    %822 = vmatprep.subr.mxu0 0.0
    %823 = vmatpush2.msra.mxu0 0.0
    %824 = vmatprep.subr.mxu0 0.0
    %825 = vmatpush2.msra.mxu0 0.0
    %826 = vmatprep.subr.mxu0 0.0
    %827 = vmatpush2.msra.mxu0 0.0
    %828 = vmatprep.subr.mxu0 0.0
    %829 = vmatpush2.msra.mxu0 0.0
    %830 = vmatprep.subr.mxu0 0.0
    %831 = vmatpush2.msra.mxu0 0.0
    %832 = vmatprep.subr.mxu0 0.0
    %833 = vmatpush2.msra.mxu0 0.0
    %834 = vmatprep.subr.mxu0 0.0
    %835 = vmatpush2.msra.mxu0 0.0
    %836 = vmatprep.subr.mxu0 0.0
    %837 = vmatpush2.msra.mxu0 0.0
    %838 = vmatprep.subr.mxu0 0.0
    %839 = vmatpush2.msra.mxu0 0.0
    %840 = vmatprep.subr.mxu0 0.0
    %841 = vmatpush2.msra.mxu0 0.0
    %842 = vmatprep.subr.mxu0 0.0
    %843 = vmatpush2.msra.mxu0 0.0
    %844 = vmatprep.subr.mxu0 0.0
    %845 = vmatpush2.msra.mxu0 0.0
    %846 = vmatprep.subr.mxu0 0.0
    %847 = vmatpush2.msra.mxu0 0.0
    %848 = vmatprep.subr.mxu0 0.0
    %849 = vmatpush2.msra.mxu0 0.0
    %850 = vmatprep.mubr.f32.mxu0 0.0
    %v851 = vand.u32 %v530, 4294901760
    %v852 = vsub.f32 %v530, %v851
    %v853 = vand.u32 %v852, 4294901760
    %854 = vmatmul.mubr.f32.gmra.mxu0 %v853
    %v855 = vpop.f32.mrf.mxu0
    %v856 = vadd.f32 %v779, %v855
    %v857 = vpop.f32.mrf.mxu0
    %858 = vdwg.mxu0
    %859 = vmatprep.subr.mxu0 0.0
    %860 = vmatpush1.msra.mxu0 0.0
    %861 = vmatprep.subr.mxu0 0.0
    %862 = vmatpush1.msra.mxu0 0.0
    %863 = vmatprep.subr.mxu0 0.0
    %864 = vmatpush1.msra.mxu0 0.0
    %865 = vmatprep.subr.mxu0 0.0
    %866 = vmatpush1.msra.mxu0 0.0
    %867 = vmatprep.subr.mxu0 0.0
    %868 = vmatpush1.msra.mxu0 0.0
    %869 = vmatprep.subr.mxu0 0.0
    %870 = vmatpush1.msra.mxu0 0.0
    %871 = vmatprep.subr.mxu0 0.0
    %872 = vmatpush1.msra.mxu0 0.0
    %873 = vmatprep.subr.mxu0 0.0
    %874 = vmatpush1.msra.mxu0 0.0
    %875 = vmatprep.subr.mxu0 0.0
    %876 = vmatpush1.msra.mxu0 0.0
    %877 = vmatprep.subr.mxu0 0.0
    %878 = vmatpush1.msra.mxu0 0.0
    %879 = vmatprep.subr.mxu0 0.0
    %880 = vmatpush1.msra.mxu0 0.0
    %881 = vmatprep.subr.mxu0 0.0
    %882 = vmatpush1.msra.mxu0 0.0
    %883 = vmatprep.subr.mxu0 0.0
    %v884 = vand.u32 %v520, 4294901760
    %v885 = vsub.f32 %v520, %v884
    %v886 = vand.u32 %v885, 4294901760
    %887 = vmatpush1.msra.mxu0 %v886
    %888 = vmatprep.subr.mxu0 0.0
    %v889 = vand.u32 %v519, 4294901760
    %v890 = vsub.f32 %v519, %v889
    %v891 = vand.u32 %v890, 4294901760
    %892 = vmatpush1.msra.mxu0 %v891
    %893 = vmatprep.subr.mxu0 0.0
    %v894 = vand.u32 %v518, 4294901760
    %v895 = vsub.f32 %v518, %v894
    %v896 = vand.u32 %v895, 4294901760
    %897 = vmatpush1.msra.mxu0 %v896
    %898 = vmatprep.subr.mxu0 0.0
    %v899 = vand.u32 %v517, 4294901760
    %v900 = vsub.f32 %v517, %v899
    %v901 = vand.u32 %v900, 4294901760
    %902 = vmatpush1.msra.mxu0 %v901
    %903 = vmatprep.subr.mxu0 0.0
    %904 = vmatpush2.msra.mxu0 0.0
    %905 = vmatprep.subr.mxu0 0.0
    %906 = vmatpush2.msra.mxu0 0.0
    %907 = vmatprep.subr.mxu0 0.0
    %908 = vmatpush2.msra.mxu0 0.0
    %909 = vmatprep.subr.mxu0 0.0
    %910 = vmatpush2.msra.mxu0 0.0
    %911 = vmatprep.subr.mxu0 0.0
    %912 = vmatpush2.msra.mxu0 0.0
    %913 = vmatprep.subr.mxu0 0.0
    %914 = vmatpush2.msra.mxu0 0.0
    %915 = vmatprep.subr.mxu0 0.0
    %916 = vmatpush2.msra.mxu0 0.0
    %917 = vmatprep.subr.mxu0 0.0
    %918 = vmatpush2.msra.mxu0 0.0
    %919 = vmatprep.subr.mxu0 0.0
    %920 = vmatpush2.msra.mxu0 0.0
    %921 = vmatprep.subr.mxu0 0.0
    %922 = vmatpush2.msra.mxu0 0.0
    %923 = vmatprep.subr.mxu0 0.0
    %924 = vmatpush2.msra.mxu0 0.0
    %925 = vmatprep.subr.mxu0 0.0
    %926 = vmatpush2.msra.mxu0 0.0
    %927 = vmatprep.subr.mxu0 0.0
    %928 = vmatpush2.msra.mxu0 0.0
    %929 = vmatprep.subr.mxu0 0.0
    %930 = vmatpush2.msra.mxu0 0.0
    %931 = vmatprep.subr.mxu0 0.0
    %932 = vmatpush2.msra.mxu0 0.0
    %933 = vmatprep.subr.mxu0 0.0
    %934 = vmatpush2.msra.mxu0 0.0
    %935 = vmatprep.mubr.f32.mxu0 0.0
    %v936 = vand.u32 %v530, 4294901760
    %937 = vmatmul.mubr.f32.gmra.mxu0 %v936
    %v938 = vpop.f32.mrf.mxu0
    %v939 = vadd.f32 %v856, %v938
    %v940 = vpop.f32.mrf.mxu0
    %941 = vdwg.mxu0
    %942 = vmatprep.subr.mxu0 0.0
    %943 = vmatpush1.msra.mxu0 0.0
    %944 = vmatprep.subr.mxu0 0.0
    %945 = vmatpush1.msra.mxu0 0.0
    %946 = vmatprep.subr.mxu0 0.0
    %947 = vmatpush1.msra.mxu0 0.0
    %948 = vmatprep.subr.mxu0 0.0
    %949 = vmatpush1.msra.mxu0 0.0
    %950 = vmatprep.subr.mxu0 0.0
    %951 = vmatpush1.msra.mxu0 0.0
    %952 = vmatprep.subr.mxu0 0.0
    %953 = vmatpush1.msra.mxu0 0.0
    %954 = vmatprep.subr.mxu0 0.0
    %955 = vmatpush1.msra.mxu0 0.0
    %956 = vmatprep.subr.mxu0 0.0
    %957 = vmatpush1.msra.mxu0 0.0
    %958 = vmatprep.subr.mxu0 0.0
    %959 = vmatpush1.msra.mxu0 0.0
    %960 = vmatprep.subr.mxu0 0.0
    %961 = vmatpush1.msra.mxu0 0.0
    %962 = vmatprep.subr.mxu0 0.0
    %963 = vmatpush1.msra.mxu0 0.0
    %964 = vmatprep.subr.mxu0 0.0
    %965 = vmatpush1.msra.mxu0 0.0
    %966 = vmatprep.subr.mxu0 0.0
    %v967 = vand.u32 %v520, 4294901760
    %968 = vmatpush1.msra.mxu0 %v967
    %969 = vmatprep.subr.mxu0 0.0
    %v970 = vand.u32 %v519, 4294901760
    %971 = vmatpush1.msra.mxu0 %v970
    %972 = vmatprep.subr.mxu0 0.0
    %v973 = vand.u32 %v518, 4294901760
    %974 = vmatpush1.msra.mxu0 %v973
    %975 = vmatprep.subr.mxu0 0.0
    %v976 = vand.u32 %v517, 4294901760
    %977 = vmatpush1.msra.mxu0 %v976
    %978 = vmatprep.subr.mxu0 0.0
    %979 = vmatpush2.msra.mxu0 0.0
    %980 = vmatprep.subr.mxu0 0.0
    %981 = vmatpush2.msra.mxu0 0.0
    %982 = vmatprep.subr.mxu0 0.0
    %983 = vmatpush2.msra.mxu0 0.0
    %984 = vmatprep.subr.mxu0 0.0
    %985 = vmatpush2.msra.mxu0 0.0
    %986 = vmatprep.subr.mxu0 0.0
    %987 = vmatpush2.msra.mxu0 0.0
    %988 = vmatprep.subr.mxu0 0.0
    %989 = vmatpush2.msra.mxu0 0.0
    %990 = vmatprep.subr.mxu0 0.0
    %991 = vmatpush2.msra.mxu0 0.0
    %992 = vmatprep.subr.mxu0 0.0
    %993 = vmatpush2.msra.mxu0 0.0
    %994 = vmatprep.subr.mxu0 0.0
    %995 = vmatpush2.msra.mxu0 0.0
    %996 = vmatprep.subr.mxu0 0.0
    %997 = vmatpush2.msra.mxu0 0.0
    %998 = vmatprep.subr.mxu0 0.0
    %999 = vmatpush2.msra.mxu0 0.0
    %1000 = vmatprep.subr.mxu0 0.0
    %1001 = vmatpush2.msra.mxu0 0.0
    %1002 = vmatprep.subr.mxu0 0.0
    %1003 = vmatpush2.msra.mxu0 0.0
    %1004 = vmatprep.subr.mxu0 0.0
    %1005 = vmatpush2.msra.mxu0 0.0
    %1006 = vmatprep.subr.mxu0 0.0
    %1007 = vmatpush2.msra.mxu0 0.0
    %1008 = vmatprep.subr.mxu0 0.0
    %1009 = vmatpush2.msra.mxu0 0.0
    %1010 = vmatprep.mubr.f32.mxu0 0.0
    %v1011 = vand.u32 %v530, 4294901760
    %1012 = vmatmul.mubr.f32.gmra.mxu0 %v1011
    %v1013 = vpop.f32.mrf.mxu0
    %v1014 = vadd.f32 %v939, %v1013
    %v1015 = vpop.f32.mrf.mxu0
    %1016 = vdwg.mxu0
    %v1017 = vmax.f32 %v1014, 0.0
    %v1018 = vld [vmem:[#allocation2] sm:$0x1]
    %v1019 = vsel %vm528, %v1017, 0.0
    %v1020 = vrot.slane %v1019, 4
    %v1021 = vadd.f32 %v1019, %v1020
    %v1022 = vrot.slane %v1021, 2
    %v1023 = vadd.f32 %v1021, %v1022
    %v1024 = vrot.slane %v1023, 1
    %v1025 = vadd.f32 %v1023, %v1024
    %v1026 = vadd.f32 %v1018, %v1025
    %vm1027 = vcmask 253952
    %1028 = vst.msk [vmem:[#allocation2] sm:$0x1] %vm1027, %v1026
    // Predicated region
    $region42: #{tpu_custom_call.1} parent=1 // pred_check
      %p1029 = pneg %p51
    $region43: #{tpu_custom_call.1} parent=1 // pred_check_branch
      %1031 = sbr.rel (%p1029) target = $region45
    $region44: #{tpu_custom_call.1} parent=1 // pred_region
      %v1032 = vld [vmem:[#allocation2] sm:$0x1]
      %v1033 = vmul.f32 %v1032, 0.125
      %v1034 = vld [vmem:[%s5] sm:$0xff]
      %v1035 = vld [vmem:[%s5 + $0x8] sm:$0xff]
      %v1036 = vld [vmem:[%s5 + $0x10] sm:$0xff]
      %v1037 = vld [vmem:[%s5 + $0x18] sm:$0xff]
      %v1038 = vld [vmem:[%s6] sm:$0x1]
      %v1040 = vsel %vm528, %v1033, 0
      %1042 = vmatprep.subr.mxu0 0.0
      %1043 = vmatpush1.msra.mxu0 0.0
      %1044 = vmatprep.subr.mxu0 0.0
      %1045 = vmatpush1.msra.mxu0 0.0
      %1046 = vmatprep.subr.mxu0 0.0
      %1047 = vmatpush1.msra.mxu0 0.0
      %1048 = vmatprep.subr.mxu0 0.0
      %1049 = vmatpush1.msra.mxu0 0.0
      %1050 = vmatprep.subr.mxu0 0.0
      %1051 = vmatpush1.msra.mxu0 0.0
      %1052 = vmatprep.subr.mxu0 0.0
      %1053 = vmatpush1.msra.mxu0 0.0
      %1054 = vmatprep.subr.mxu0 0.0
      %1055 = vmatpush1.msra.mxu0 0.0
      %1056 = vmatprep.subr.mxu0 0.0
      %1057 = vmatpush1.msra.mxu0 0.0
      %1058 = vmatprep.subr.mxu0 0.0
      %1059 = vmatpush1.msra.mxu0 0.0
      %1060 = vmatprep.subr.mxu0 0.0
      %1061 = vmatpush1.msra.mxu0 0.0
      %1062 = vmatprep.subr.mxu0 0.0
      %1063 = vmatpush1.msra.mxu0 0.0
      %1064 = vmatprep.subr.mxu0 0.0
      %1065 = vmatpush1.msra.mxu0 0.0
      %1066 = vmatprep.subr.mxu0 0.0
      %v1067 = vand.u32 %v1037, 4294901760
      %1068 = vmatpush1.msra.mxu0 %v1067
      %1069 = vmatprep.subr.mxu0 0.0
      %v1070 = vand.u32 %v1036, 4294901760
      %1071 = vmatpush1.msra.mxu0 %v1070
      %1072 = vmatprep.subr.mxu0 0.0
      %v1073 = vand.u32 %v1035, 4294901760
      %1074 = vmatpush1.msra.mxu0 %v1073
      %1075 = vmatprep.subr.mxu0 0.0
      %v1076 = vand.u32 %v1034, 4294901760
      %1077 = vmatpush1.msra.mxu0 %v1076
      %1078 = vmatprep.subr.mxu0 0.0
      %1079 = vmatpush2.msra.mxu0 0.0
      %1080 = vmatprep.subr.mxu0 0.0
      %1081 = vmatpush2.msra.mxu0 0.0
      %1082 = vmatprep.subr.mxu0 0.0
      %1083 = vmatpush2.msra.mxu0 0.0
      %1084 = vmatprep.subr.mxu0 0.0
      %1085 = vmatpush2.msra.mxu0 0.0
      %1086 = vmatprep.subr.mxu0 0.0
      %1087 = vmatpush2.msra.mxu0 0.0
      %1088 = vmatprep.subr.mxu0 0.0
      %1089 = vmatpush2.msra.mxu0 0.0
      %1090 = vmatprep.subr.mxu0 0.0
      %1091 = vmatpush2.msra.mxu0 0.0
      %1092 = vmatprep.subr.mxu0 0.0
      %1093 = vmatpush2.msra.mxu0 0.0
      %1094 = vmatprep.subr.mxu0 0.0
      %1095 = vmatpush2.msra.mxu0 0.0
      %1096 = vmatprep.subr.mxu0 0.0
      %1097 = vmatpush2.msra.mxu0 0.0
      %1098 = vmatprep.subr.mxu0 0.0
      %1099 = vmatpush2.msra.mxu0 0.0
      %1100 = vmatprep.subr.mxu0 0.0
      %1101 = vmatpush2.msra.mxu0 0.0
      %1102 = vmatprep.subr.mxu0 0.0
      %1103 = vmatpush2.msra.mxu0 0.0
      %1104 = vmatprep.subr.mxu0 0.0
      %1105 = vmatpush2.msra.mxu0 0.0
      %1106 = vmatprep.subr.mxu0 0.0
      %1107 = vmatpush2.msra.mxu0 0.0
      %1108 = vmatprep.subr.mxu0 0.0
      %1109 = vmatpush2.msra.mxu0 0.0
      %1110 = vmatprep.mubr.f32.mxu0 0.0
      %v1111 = vand.u32 %v1040, 4294901760
      %v1112 = vsub.f32 %v1040, %v1111
      %v1113 = vand.u32 %v1112, 4294901760
      %v1114 = vsub.f32 %v1112, %v1113
      %v1115 = vand.u32 %v1114, 4294901760
      %1116 = vmatmul.mubr.f32.gmra.mxu0 %v1115
      %v1117 = vpop.f32.mrf.mxu0
      %v1118 = vadd.f32 %v1038, %v1117
      %v1119 = vpop.f32.mrf.mxu0
      %1120 = vdwg.mxu0
      %1121 = vmatprep.subr.mxu0 0.0
      %1122 = vmatpush1.msra.mxu0 0.0
      %1123 = vmatprep.subr.mxu0 0.0
      %1124 = vmatpush1.msra.mxu0 0.0
      %1125 = vmatprep.subr.mxu0 0.0
      %1126 = vmatpush1.msra.mxu0 0.0
      %1127 = vmatprep.subr.mxu0 0.0
      %1128 = vmatpush1.msra.mxu0 0.0
      %1129 = vmatprep.subr.mxu0 0.0
      %1130 = vmatpush1.msra.mxu0 0.0
      %1131 = vmatprep.subr.mxu0 0.0
      %1132 = vmatpush1.msra.mxu0 0.0
      %1133 = vmatprep.subr.mxu0 0.0
      %1134 = vmatpush1.msra.mxu0 0.0
      %1135 = vmatprep.subr.mxu0 0.0
      %1136 = vmatpush1.msra.mxu0 0.0
      %1137 = vmatprep.subr.mxu0 0.0
      %1138 = vmatpush1.msra.mxu0 0.0
      %1139 = vmatprep.subr.mxu0 0.0
      %1140 = vmatpush1.msra.mxu0 0.0
      %1141 = vmatprep.subr.mxu0 0.0
      %1142 = vmatpush1.msra.mxu0 0.0
      %1143 = vmatprep.subr.mxu0 0.0
      %1144 = vmatpush1.msra.mxu0 0.0
      %1145 = vmatprep.subr.mxu0 0.0
      %v1146 = vand.u32 %v1037, 4294901760
      %v1147 = vsub.f32 %v1037, %v1146
      %v1148 = vand.u32 %v1147, 4294901760
      %v1149 = vsub.f32 %v1147, %v1148
      %v1150 = vand.u32 %v1149, 4294901760
      %1151 = vmatpush1.msra.mxu0 %v1150
      %1152 = vmatprep.subr.mxu0 0.0
      %v1153 = vand.u32 %v1036, 4294901760
      %v1154 = vsub.f32 %v1036, %v1153
      %v1155 = vand.u32 %v1154, 4294901760
      %v1156 = vsub.f32 %v1154, %v1155
      %v1157 = vand.u32 %v1156, 4294901760
      %1158 = vmatpush1.msra.mxu0 %v1157
      %1159 = vmatprep.subr.mxu0 0.0
      %v1160 = vand.u32 %v1035, 4294901760
      %v1161 = vsub.f32 %v1035, %v1160
      %v1162 = vand.u32 %v1161, 4294901760
      %v1163 = vsub.f32 %v1161, %v1162
      %v1164 = vand.u32 %v1163, 4294901760
      %1165 = vmatpush1.msra.mxu0 %v1164
      %1166 = vmatprep.subr.mxu0 0.0
      %v1167 = vand.u32 %v1034, 4294901760
      %v1168 = vsub.f32 %v1034, %v1167
      %v1169 = vand.u32 %v1168, 4294901760
      %v1170 = vsub.f32 %v1168, %v1169
      %v1171 = vand.u32 %v1170, 4294901760
      %1172 = vmatpush1.msra.mxu0 %v1171
      %1173 = vmatprep.subr.mxu0 0.0
      %1174 = vmatpush2.msra.mxu0 0.0
      %1175 = vmatprep.subr.mxu0 0.0
      %1176 = vmatpush2.msra.mxu0 0.0
      %1177 = vmatprep.subr.mxu0 0.0
      %1178 = vmatpush2.msra.mxu0 0.0
      %1179 = vmatprep.subr.mxu0 0.0
      %1180 = vmatpush2.msra.mxu0 0.0
      %1181 = vmatprep.subr.mxu0 0.0
      %1182 = vmatpush2.msra.mxu0 0.0
      %1183 = vmatprep.subr.mxu0 0.0
      %1184 = vmatpush2.msra.mxu0 0.0
      %1185 = vmatprep.subr.mxu0 0.0
      %1186 = vmatpush2.msra.mxu0 0.0
      %1187 = vmatprep.subr.mxu0 0.0
      %1188 = vmatpush2.msra.mxu0 0.0
      %1189 = vmatprep.subr.mxu0 0.0
      %1190 = vmatpush2.msra.mxu0 0.0
      %1191 = vmatprep.subr.mxu0 0.0
      %1192 = vmatpush2.msra.mxu0 0.0
      %1193 = vmatprep.subr.mxu0 0.0
      %1194 = vmatpush2.msra.mxu0 0.0
      %1195 = vmatprep.subr.mxu0 0.0
      %1196 = vmatpush2.msra.mxu0 0.0
      %1197 = vmatprep.subr.mxu0 0.0
      %1198 = vmatpush2.msra.mxu0 0.0
      %1199 = vmatprep.subr.mxu0 0.0
      %1200 = vmatpush2.msra.mxu0 0.0
      %1201 = vmatprep.subr.mxu0 0.0
      %1202 = vmatpush2.msra.mxu0 0.0
      %1203 = vmatprep.subr.mxu0 0.0
      %1204 = vmatpush2.msra.mxu0 0.0
      %1205 = vmatprep.mubr.f32.mxu0 0.0
      %v1206 = vand.u32 %v1040, 4294901760
      %1207 = vmatmul.mubr.f32.gmra.mxu0 %v1206
      %v1208 = vpop.f32.mrf.mxu0
      %v1209 = vadd.f32 %v1118, %v1208
      %v1210 = vpop.f32.mrf.mxu0
      %1211 = vdwg.mxu0
      %1212 = vmatprep.subr.mxu0 0.0
      %1213 = vmatpush1.msra.mxu0 0.0
      %1214 = vmatprep.subr.mxu0 0.0
      %1215 = vmatpush1.msra.mxu0 0.0
      %1216 = vmatprep.subr.mxu0 0.0
      %1217 = vmatpush1.msra.mxu0 0.0
      %1218 = vmatprep.subr.mxu0 0.0
      %1219 = vmatpush1.msra.mxu0 0.0
      %1220 = vmatprep.subr.mxu0 0.0
      %1221 = vmatpush1.msra.mxu0 0.0
      %1222 = vmatprep.subr.mxu0 0.0
      %1223 = vmatpush1.msra.mxu0 0.0
      %1224 = vmatprep.subr.mxu0 0.0
      %1225 = vmatpush1.msra.mxu0 0.0
      %1226 = vmatprep.subr.mxu0 0.0
      %1227 = vmatpush1.msra.mxu0 0.0
      %1228 = vmatprep.subr.mxu0 0.0
      %1229 = vmatpush1.msra.mxu0 0.0
      %1230 = vmatprep.subr.mxu0 0.0
      %1231 = vmatpush1.msra.mxu0 0.0
      %1232 = vmatprep.subr.mxu0 0.0
      %1233 = vmatpush1.msra.mxu0 0.0
      %1234 = vmatprep.subr.mxu0 0.0
      %1235 = vmatpush1.msra.mxu0 0.0
      %1236 = vmatprep.subr.mxu0 0.0
      %v1237 = vand.u32 %v1037, 4294901760
      %v1238 = vsub.f32 %v1037, %v1237
      %1239 = vmatpush1.msra.mxu0 %v1238
      %1240 = vmatprep.subr.mxu0 0.0
      %v1241 = vand.u32 %v1036, 4294901760
      %v1242 = vsub.f32 %v1036, %v1241
      %1243 = vmatpush1.msra.mxu0 %v1242
      %1244 = vmatprep.subr.mxu0 0.0
      %v1245 = vand.u32 %v1035, 4294901760
      %v1246 = vsub.f32 %v1035, %v1245
      %1247 = vmatpush1.msra.mxu0 %v1246
      %1248 = vmatprep.subr.mxu0 0.0
      %v1249 = vand.u32 %v1034, 4294901760
      %v1250 = vsub.f32 %v1034, %v1249
      %1251 = vmatpush1.msra.mxu0 %v1250
      %1252 = vmatprep.subr.mxu0 0.0
      %1253 = vmatpush2.msra.mxu0 0.0
      %1254 = vmatprep.subr.mxu0 0.0
      %1255 = vmatpush2.msra.mxu0 0.0
      %1256 = vmatprep.subr.mxu0 0.0
      %1257 = vmatpush2.msra.mxu0 0.0
      %1258 = vmatprep.subr.mxu0 0.0
      %1259 = vmatpush2.msra.mxu0 0.0
      %1260 = vmatprep.subr.mxu0 0.0
      %1261 = vmatpush2.msra.mxu0 0.0
      %1262 = vmatprep.subr.mxu0 0.0
      %1263 = vmatpush2.msra.mxu0 0.0
      %1264 = vmatprep.subr.mxu0 0.0
      %1265 = vmatpush2.msra.mxu0 0.0
      %1266 = vmatprep.subr.mxu0 0.0
      %1267 = vmatpush2.msra.mxu0 0.0
      %1268 = vmatprep.subr.mxu0 0.0
      %1269 = vmatpush2.msra.mxu0 0.0
      %1270 = vmatprep.subr.mxu0 0.0
      %1271 = vmatpush2.msra.mxu0 0.0
      %1272 = vmatprep.subr.mxu0 0.0
      %1273 = vmatpush2.msra.mxu0 0.0
      %1274 = vmatprep.subr.mxu0 0.0
      %1275 = vmatpush2.msra.mxu0 0.0
      %1276 = vmatprep.subr.mxu0 0.0
      %1277 = vmatpush2.msra.mxu0 0.0
      %1278 = vmatprep.subr.mxu0 0.0
      %1279 = vmatpush2.msra.mxu0 0.0
      %1280 = vmatprep.subr.mxu0 0.0
      %1281 = vmatpush2.msra.mxu0 0.0
      %1282 = vmatprep.subr.mxu0 0.0
      %1283 = vmatpush2.msra.mxu0 0.0
      %1284 = vmatprep.mubr.f32.mxu0 0.0
      %v1285 = vand.u32 %v1040, 4294901760
      %v1286 = vsub.f32 %v1040, %v1285
      %1287 = vmatmul.mubr.f32.gmra.mxu0 %v1286
      %v1288 = vpop.f32.mrf.mxu0
      %v1289 = vadd.f32 %v1209, %v1288
      %v1290 = vpop.f32.mrf.mxu0
      %1291 = vdwg.mxu0
      %1292 = vmatprep.subr.mxu0 0.0
      %1293 = vmatpush1.msra.mxu0 0.0
      %1294 = vmatprep.subr.mxu0 0.0
      %1295 = vmatpush1.msra.mxu0 0.0
      %1296 = vmatprep.subr.mxu0 0.0
      %1297 = vmatpush1.msra.mxu0 0.0
      %1298 = vmatprep.subr.mxu0 0.0
      %1299 = vmatpush1.msra.mxu0 0.0
      %1300 = vmatprep.subr.mxu0 0.0
      %1301 = vmatpush1.msra.mxu0 0.0
      %1302 = vmatprep.subr.mxu0 0.0
      %1303 = vmatpush1.msra.mxu0 0.0
      %1304 = vmatprep.subr.mxu0 0.0
      %1305 = vmatpush1.msra.mxu0 0.0
      %1306 = vmatprep.subr.mxu0 0.0
      %1307 = vmatpush1.msra.mxu0 0.0
      %1308 = vmatprep.subr.mxu0 0.0
      %1309 = vmatpush1.msra.mxu0 0.0
      %1310 = vmatprep.subr.mxu0 0.0
      %1311 = vmatpush1.msra.mxu0 0.0
      %1312 = vmatprep.subr.mxu0 0.0
      %1313 = vmatpush1.msra.mxu0 0.0
      %1314 = vmatprep.subr.mxu0 0.0
      %1315 = vmatpush1.msra.mxu0 0.0
      %1316 = vmatprep.subr.mxu0 0.0
      %v1317 = vand.u32 %v1037, 4294901760
      %1318 = vmatpush1.msra.mxu0 %v1317
      %1319 = vmatprep.subr.mxu0 0.0
      %v1320 = vand.u32 %v1036, 4294901760
      %1321 = vmatpush1.msra.mxu0 %v1320
      %1322 = vmatprep.subr.mxu0 0.0
      %v1323 = vand.u32 %v1035, 4294901760
      %1324 = vmatpush1.msra.mxu0 %v1323
      %1325 = vmatprep.subr.mxu0 0.0
      %v1326 = vand.u32 %v1034, 4294901760
      %1327 = vmatpush1.msra.mxu0 %v1326
      %1328 = vmatprep.subr.mxu0 0.0
      %1329 = vmatpush2.msra.mxu0 0.0
      %1330 = vmatprep.subr.mxu0 0.0
      %1331 = vmatpush2.msra.mxu0 0.0
      %1332 = vmatprep.subr.mxu0 0.0
      %1333 = vmatpush2.msra.mxu0 0.0
      %1334 = vmatprep.subr.mxu0 0.0
      %1335 = vmatpush2.msra.mxu0 0.0
      %1336 = vmatprep.subr.mxu0 0.0
      %1337 = vmatpush2.msra.mxu0 0.0
      %1338 = vmatprep.subr.mxu0 0.0
      %1339 = vmatpush2.msra.mxu0 0.0
      %1340 = vmatprep.subr.mxu0 0.0
      %1341 = vmatpush2.msra.mxu0 0.0
      %1342 = vmatprep.subr.mxu0 0.0
      %1343 = vmatpush2.msra.mxu0 0.0
      %1344 = vmatprep.subr.mxu0 0.0
      %1345 = vmatpush2.msra.mxu0 0.0
      %1346 = vmatprep.subr.mxu0 0.0
      %1347 = vmatpush2.msra.mxu0 0.0
      %1348 = vmatprep.subr.mxu0 0.0
      %1349 = vmatpush2.msra.mxu0 0.0
      %1350 = vmatprep.subr.mxu0 0.0
      %1351 = vmatpush2.msra.mxu0 0.0
      %1352 = vmatprep.subr.mxu0 0.0
      %1353 = vmatpush2.msra.mxu0 0.0
      %1354 = vmatprep.subr.mxu0 0.0
      %1355 = vmatpush2.msra.mxu0 0.0
      %1356 = vmatprep.subr.mxu0 0.0
      %1357 = vmatpush2.msra.mxu0 0.0
      %1358 = vmatprep.subr.mxu0 0.0
      %1359 = vmatpush2.msra.mxu0 0.0
      %1360 = vmatprep.mubr.f32.mxu0 0.0
      %v1361 = vand.u32 %v1040, 4294901760
      %v1362 = vsub.f32 %v1040, %v1361
      %v1363 = vand.u32 %v1362, 4294901760
      %1364 = vmatmul.mubr.f32.gmra.mxu0 %v1363
      %v1365 = vpop.f32.mrf.mxu0
      %v1366 = vadd.f32 %v1289, %v1365
      %v1367 = vpop.f32.mrf.mxu0
      %1368 = vdwg.mxu0
      %1369 = vmatprep.subr.mxu0 0.0
      %1370 = vmatpush1.msra.mxu0 0.0
      %1371 = vmatprep.subr.mxu0 0.0
      %1372 = vmatpush1.msra.mxu0 0.0
      %1373 = vmatprep.subr.mxu0 0.0
      %1374 = vmatpush1.msra.mxu0 0.0
      %1375 = vmatprep.subr.mxu0 0.0
      %1376 = vmatpush1.msra.mxu0 0.0
      %1377 = vmatprep.subr.mxu0 0.0
      %1378 = vmatpush1.msra.mxu0 0.0
      %1379 = vmatprep.subr.mxu0 0.0
      %1380 = vmatpush1.msra.mxu0 0.0
      %1381 = vmatprep.subr.mxu0 0.0
      %1382 = vmatpush1.msra.mxu0 0.0
      %1383 = vmatprep.subr.mxu0 0.0
      %1384 = vmatpush1.msra.mxu0 0.0
      %1385 = vmatprep.subr.mxu0 0.0
      %1386 = vmatpush1.msra.mxu0 0.0
      %1387 = vmatprep.subr.mxu0 0.0
      %1388 = vmatpush1.msra.mxu0 0.0
      %1389 = vmatprep.subr.mxu0 0.0
      %1390 = vmatpush1.msra.mxu0 0.0
      %1391 = vmatprep.subr.mxu0 0.0
      %1392 = vmatpush1.msra.mxu0 0.0
      %1393 = vmatprep.subr.mxu0 0.0
      %v1394 = vand.u32 %v1037, 4294901760
      %v1395 = vsub.f32 %v1037, %v1394
      %v1396 = vand.u32 %v1395, 4294901760
      %1397 = vmatpush1.msra.mxu0 %v1396
      %1398 = vmatprep.subr.mxu0 0.0
      %v1399 = vand.u32 %v1036, 4294901760
      %v1400 = vsub.f32 %v1036, %v1399
      %v1401 = vand.u32 %v1400, 4294901760
      %1402 = vmatpush1.msra.mxu0 %v1401
      %1403 = vmatprep.subr.mxu0 0.0
      %v1404 = vand.u32 %v1035, 4294901760
      %v1405 = vsub.f32 %v1035, %v1404
      %v1406 = vand.u32 %v1405, 4294901760
      %1407 = vmatpush1.msra.mxu0 %v1406
      %1408 = vmatprep.subr.mxu0 0.0
      %v1409 = vand.u32 %v1034, 4294901760
      %v1410 = vsub.f32 %v1034, %v1409
      %v1411 = vand.u32 %v1410, 4294901760
      %1412 = vmatpush1.msra.mxu0 %v1411
      %1413 = vmatprep.subr.mxu0 0.0
      %1414 = vmatpush2.msra.mxu0 0.0
      %1415 = vmatprep.subr.mxu0 0.0
      %1416 = vmatpush2.msra.mxu0 0.0
      %1417 = vmatprep.subr.mxu0 0.0
      %1418 = vmatpush2.msra.mxu0 0.0
      %1419 = vmatprep.subr.mxu0 0.0
      %1420 = vmatpush2.msra.mxu0 0.0
      %1421 = vmatprep.subr.mxu0 0.0
      %1422 = vmatpush2.msra.mxu0 0.0
      %1423 = vmatprep.subr.mxu0 0.0
      %1424 = vmatpush2.msra.mxu0 0.0
      %1425 = vmatprep.subr.mxu0 0.0
      %1426 = vmatpush2.msra.mxu0 0.0
      %1427 = vmatprep.subr.mxu0 0.0
      %1428 = vmatpush2.msra.mxu0 0.0
      %1429 = vmatprep.subr.mxu0 0.0
      %1430 = vmatpush2.msra.mxu0 0.0
      %1431 = vmatprep.subr.mxu0 0.0
      %1432 = vmatpush2.msra.mxu0 0.0
      %1433 = vmatprep.subr.mxu0 0.0
      %1434 = vmatpush2.msra.mxu0 0.0
      %1435 = vmatprep.subr.mxu0 0.0
      %1436 = vmatpush2.msra.mxu0 0.0
      %1437 = vmatprep.subr.mxu0 0.0
      %1438 = vmatpush2.msra.mxu0 0.0
      %1439 = vmatprep.subr.mxu0 0.0
      %1440 = vmatpush2.msra.mxu0 0.0
      %1441 = vmatprep.subr.mxu0 0.0
      %1442 = vmatpush2.msra.mxu0 0.0
      %1443 = vmatprep.subr.mxu0 0.0
      %1444 = vmatpush2.msra.mxu0 0.0
      %1445 = vmatprep.mubr.f32.mxu0 0.0
      %v1446 = vand.u32 %v1040, 4294901760
      %1447 = vmatmul.mubr.f32.gmra.mxu0 %v1446
      %v1448 = vpop.f32.mrf.mxu0
      %v1449 = vadd.f32 %v1366, %v1448
      %v1450 = vpop.f32.mrf.mxu0
      %1451 = vdwg.mxu0
      %1452 = vmatprep.subr.mxu0 0.0
      %1453 = vmatpush1.msra.mxu0 0.0
      %1454 = vmatprep.subr.mxu0 0.0
      %1455 = vmatpush1.msra.mxu0 0.0
      %1456 = vmatprep.subr.mxu0 0.0
      %1457 = vmatpush1.msra.mxu0 0.0
      %1458 = vmatprep.subr.mxu0 0.0
      %1459 = vmatpush1.msra.mxu0 0.0
      %1460 = vmatprep.subr.mxu0 0.0
      %1461 = vmatpush1.msra.mxu0 0.0
      %1462 = vmatprep.subr.mxu0 0.0
      %1463 = vmatpush1.msra.mxu0 0.0
      %1464 = vmatprep.subr.mxu0 0.0
      %1465 = vmatpush1.msra.mxu0 0.0
      %1466 = vmatprep.subr.mxu0 0.0
      %1467 = vmatpush1.msra.mxu0 0.0
      %1468 = vmatprep.subr.mxu0 0.0
      %1469 = vmatpush1.msra.mxu0 0.0
      %1470 = vmatprep.subr.mxu0 0.0
      %1471 = vmatpush1.msra.mxu0 0.0
      %1472 = vmatprep.subr.mxu0 0.0
      %1473 = vmatpush1.msra.mxu0 0.0
      %1474 = vmatprep.subr.mxu0 0.0
      %1475 = vmatpush1.msra.mxu0 0.0
      %1476 = vmatprep.subr.mxu0 0.0
      %v1477 = vand.u32 %v1037, 4294901760
      %1478 = vmatpush1.msra.mxu0 %v1477
      %1479 = vmatprep.subr.mxu0 0.0
      %v1480 = vand.u32 %v1036, 4294901760
      %1481 = vmatpush1.msra.mxu0 %v1480
      %1482 = vmatprep.subr.mxu0 0.0
      %v1483 = vand.u32 %v1035, 4294901760
      %1484 = vmatpush1.msra.mxu0 %v1483
      %1485 = vmatprep.subr.mxu0 0.0
      %v1486 = vand.u32 %v1034, 4294901760
      %1487 = vmatpush1.msra.mxu0 %v1486
      %1488 = vmatprep.subr.mxu0 0.0
      %1489 = vmatpush2.msra.mxu0 0.0
      %1490 = vmatprep.subr.mxu0 0.0
      %1491 = vmatpush2.msra.mxu0 0.0
      %1492 = vmatprep.subr.mxu0 0.0
      %1493 = vmatpush2.msra.mxu0 0.0
      %1494 = vmatprep.subr.mxu0 0.0
      %1495 = vmatpush2.msra.mxu0 0.0
      %1496 = vmatprep.subr.mxu0 0.0
      %1497 = vmatpush2.msra.mxu0 0.0
      %1498 = vmatprep.subr.mxu0 0.0
      %1499 = vmatpush2.msra.mxu0 0.0
      %1500 = vmatprep.subr.mxu0 0.0
      %1501 = vmatpush2.msra.mxu0 0.0
      %1502 = vmatprep.subr.mxu0 0.0
      %1503 = vmatpush2.msra.mxu0 0.0
      %1504 = vmatprep.subr.mxu0 0.0
      %1505 = vmatpush2.msra.mxu0 0.0
      %1506 = vmatprep.subr.mxu0 0.0
      %1507 = vmatpush2.msra.mxu0 0.0
      %1508 = vmatprep.subr.mxu0 0.0
      %1509 = vmatpush2.msra.mxu0 0.0
      %1510 = vmatprep.subr.mxu0 0.0
      %1511 = vmatpush2.msra.mxu0 0.0
      %1512 = vmatprep.subr.mxu0 0.0
      %1513 = vmatpush2.msra.mxu0 0.0
      %1514 = vmatprep.subr.mxu0 0.0
      %1515 = vmatpush2.msra.mxu0 0.0
      %1516 = vmatprep.subr.mxu0 0.0
      %1517 = vmatpush2.msra.mxu0 0.0
      %1518 = vmatprep.subr.mxu0 0.0
      %1519 = vmatpush2.msra.mxu0 0.0
      %1520 = vmatprep.mubr.f32.mxu0 0.0
      %v1521 = vand.u32 %v1040, 4294901760
      %1522 = vmatmul.mubr.f32.gmra.mxu0 %v1521
      %v1523 = vpop.f32.mrf.mxu0
      %v1524 = vadd.f32 %v1449, %v1523
      %v1525 = vpop.f32.mrf.mxu0
      %1526 = vdwg.mxu0
      %vm1527 = vcmask 24576
      %1528 = vst.msk [vmem:[#allocation8] sm:$0x1] %vm1527, %v1524
    $region45: #{tpu_custom_call.1} parent=1 // pred_fallthru
      _
    // Predicated region
    $region46: #{tpu_custom_call.1} parent=1 // pred_check
      _
    $region47: #{tpu_custom_call.1} parent=1 // pred_check_branch
      %1530 = sbr.rel (0) target = $region49
    $region48: #{tpu_custom_call.1} parent=1 // pred_region
      %s1532 = ssub.s32 16, 16
      %1533 = vsyncadd [#allocation5], %s1532
      %s1535 = sshll.u32 [#allocation8], 4
      %s1536 = int_to_ptr.vmem [resolvable:$true] %s1535
      %1538 = dma.vmem_to_hbm [thread:$0]  %s1536, 16, %s7, [#allocation5]
    $region49: #{tpu_custom_call.1} parent=1 // pred_fallthru
      _
    // Predicated region
    $region50: #{tpu_custom_call.1} parent=1 // pred_check
      _
    $region51: #{tpu_custom_call.1} parent=1 // pred_check_branch
      %1540 = sbr.rel (0) target = $region53
    $region52: #{tpu_custom_call.1} parent=1 // pred_region
      %1541 = dma.done [#allocation5], 16
    $region53: #{tpu_custom_call.1} parent=1 // pred_fallthru
      _
    %1542 = vsyncpa [#allocation4], 1
    %1543 = vsyncpa [#allocation7], 1
    %1544 = vsyncpa [#allocation5], 1

</llo_original>
